<compile_context>
chip_gen: v7x
topology: tpu7x:2x2x1
jax: 0.10.0
libtpu: 0.0.40
codegen_flags: <defaults>
</compile_context>

<pallas_src>
import functools

import jax
import jax.numpy as jnp
from jax.experimental import pallas as pl
from jax.experimental.pallas import tpu as pltpu

B, C, H, W = 2, 1536, 12, 12   # n_features = 1536, AvgPool2d(kernel_size=12)
HW = H * W
NOUT = 3 + 2 + 3               # [age | gender | mask]


# -----------------------------------------------------------------------------
# Kernels
# -----------------------------------------------------------------------------
def _head_kernel_row(feat_ref, wt_ref, b_ref, out_ref, *, inv_hw):
    """Per-batch-row kernel (grid=(B,), used on v7x to shard rows across TCs).

    feat_ref: (C, HW)   -- leading batch dim squeezed away
    wt_ref:   (NOUT, C) -- fused, pre-transposed head weight
    b_ref:    (NOUT, 1) -- fused bias (column)
    out_ref:  (NOUT, 1) -- column of logits for this batch row
    """
    # MXU contraction over C=1536 (replaces the old XLU mean over 1536x144).
    tmp = jnp.dot(wt_ref[...], feat_ref[...],
                  preferred_element_type=jnp.float32)            # (NOUT, HW)
    # Tiny (NOUT, HW) lane reduce + scale + bias == AvgPool2d(12) folded in.
    out_ref[...] = tmp.sum(axis=-1, keepdims=True) * inv_hw + b_ref[...]


def _head_kernel_batch(feat_ref, wt_ref, b_ref, out_ref, *, inv_hw, nb):
    """Whole-batch kernel (single grid step, used on single-TC v5e/v6e).

    feat_ref: (B, C, HW)
    wt_ref:   (NOUT, C)
    b_ref:    (NOUT, 1)
    out_ref:  (NOUT, B) -- one lane-packed store for the whole batch
    """
    wt = wt_ref[...]                                             # (NOUT, C)
    cols = []
    for bi in range(nb):                                         # static, nb == B
        tmp = jnp.dot(wt, feat_ref[bi],
                      preferred_element_type=jnp.float32)        # (NOUT, HW)
        cols.append(tmp.sum(axis=-1, keepdims=True))             # (NOUT, 1)
    sums = cols[0] if nb == 1 else jnp.concatenate(cols, axis=1)  # (NOUT, B)
    out_ref[...] = sums * inv_hw + b_ref[...]


# -----------------------------------------------------------------------------
# Wrapper
# -----------------------------------------------------------------------------
def make_head_params(wa, ba, wg, bg, wm, bm, dtype=jnp.float32):
    """Fuse the three Linear heads ONCE at init (hoisted out of the forward).

    Returns w_t (NOUT, C) pre-transposed for the MXU formulation and the fused
    bias as a (NOUT, 1) column.
    """
    w_cat = jnp.concatenate([wa, wg, wm], axis=1)                # (C, NOUT)
    b_cat = jnp.concatenate([ba, bg, bm], axis=1)                # (1, NOUT)
    return w_cat.T.astype(dtype), b_cat.T.astype(jnp.float32)    # (NOUT,C),(NOUT,1)


def _use_per_row_grid():
    # v7x has 2 TensorCores per chip: keep grid=(B,) + ("parallel",) so each
    # TC issues its own feature-row DMA. v5e/v6e are single-TC: collapse.
    try:
        return "v7" in jax.devices()[0].device_kind.lower()
    except Exception:
        return False


def custom_resnext_head(feat_nchw, w_t, b_col, *, per_row_grid=None):
    """feat_nchw: (B, C, H, W) backbone features (float32 or bfloat16).

    Returns (age (B,3), gender (B,2), mask (B,3)) float32 logits, matching the
    (x, y, z) tuple of CustomResNext.forward.
    """
    b, c, h, w = feat_nchw.shape
    hw = h * w
    n_out = w_t.shape[0]
    inv_hw = 1.0 / float(hw)
    if per_row_grid is None:
        per_row_grid = _use_per_row_grid()

    # Native layout: (B, C, H*W). Contiguous collapse — no data movement.
    feat = feat_nchw.reshape(b, c, hw)
    if w_t.dtype != feat.dtype:          # bf16 weights for bf16 features
        w_t = w_t.astype(feat.dtype)     # (no-op when dtypes already match)

    itemsize = feat.dtype.itemsize
    cost = pl.CostEstimate(
        flops=2 * b * n_out * c * hw + b * n_out * hw + 2 * b * n_out,
        transcendentals=0,
        bytes_accessed=(feat.size * itemsize + w_t.size * itemsize
                        + 4 * (b_col.size + b * n_out)),
    )

    if per_row_grid:
        # v7x: one grid step per batch row, sharded across the two TCs.
        grid_spec = pltpu.PrefetchScalarGridSpec(
            num_scalar_prefetch=0,
            grid=(b,),
            in_specs=[
                pl.BlockSpec((pl.Squeezed(), c, hw), lambda i: (i, 0, 0)),
                pl.BlockSpec((n_out, c), lambda i: (0, 0)),
                pl.BlockSpec((n_out, 1), lambda i: (0, 0)),
            ],
            out_specs=pl.BlockSpec((pl.Squeezed(), n_out, 1),
                                   lambda i: (i, 0, 0)),
        )
        out = pl.pallas_call(
            functools.partial(_head_kernel_row, inv_hw=inv_hw),
            out_shape=jax.ShapeDtypeStruct((b, n_out, 1), jnp.float32),
            grid_spec=grid_spec,
            compiler_params=pltpu.CompilerParams(
                dimension_semantics=("parallel",)),
            cost_estimate=cost,
        )(feat, w_t, b_col)
        out = out.reshape(b, n_out)                              # free collapse
    else:
        # v5e/v6e: single TC -> single grid step, one feature DMA, one store.
        grid_spec = pltpu.PrefetchScalarGridSpec(
            num_scalar_prefetch=0,
            grid=(1,),
            in_specs=[
                pl.BlockSpec((b, c, hw), lambda i: (0, 0, 0)),
                pl.BlockSpec((n_out, c), lambda i: (0, 0)),
                pl.BlockSpec((n_out, 1), lambda i: (0, 0)),
            ],
            out_specs=pl.BlockSpec((n_out, b), lambda i: (0, 0)),
        )
        out = pl.pallas_call(
            functools.partial(_head_kernel_batch, inv_hw=inv_hw, nb=b),
            out_shape=jax.ShapeDtypeStruct((n_out, b), jnp.float32),
            grid_spec=grid_spec,
            compiler_params=pltpu.CompilerParams(
                dimension_semantics=("arbitrary",)),
            cost_estimate=cost,
        )(feat, w_t, b_col)
        out = out.T                                              # (B, NOUT), 16 floats

    age = out[:, 0:3]
    gender = out[:, 3:5]
    mask = out[:, 5:8]
    return age, gender, mask


# -----------------------------------------------------------------------------
# Init / reference / test harness
# -----------------------------------------------------------------------------
def _init_linear(key, fan_in, fan_out):
    # Mirrors torch.nn.Linear default init: U(-1/sqrt(fan_in), 1/sqrt(fan_in)).
    kw, kb = jax.random.split(key)
    bound = 1.0 / jnp.sqrt(jnp.float32(fan_in))
    # Stored as (in, out) so reference does x @ W (== x @ W_torch.T).
    w = jax.random.uniform(kw, (fan_in, fan_out), jnp.float32, -bound, bound)
    b = jax.random.uniform(kb, (1, fan_out), jnp.float32, -bound, bound)
    return w, b


def _reference(feat_nchw, wa, ba, wg, bg, wm, bm):
    b = feat_nchw.shape[0]
    pooled = jnp.mean(feat_nchw.reshape(b, C, HW), axis=-1)      # (B, C)
    age = pooled @ wa + ba
    gender = pooled @ wg + bg
    mask = pooled @ wm + bm
    return age, gender, mask


if __name__ == "__main__":
    key = jax.random.PRNGKey(0)
    k_feat, k_age, k_gen, k_mask = jax.random.split(key, 4)

    # Synthetic backbone feature map (what forward_features would produce).
    x = jax.random.normal(k_feat, (B, C, H, W), jnp.float32)

    wa, ba = _init_linear(k_age, C, 3)    # age_classifier
    wg, bg = _init_linear(k_gen, C, 2)    # gender_classifier
    wm, bm = _init_linear(k_mask, C, 3)   # mask_classifier

    # Pure-JAX reference of the same head math.
    age_r, gender_r, mask_r = _reference(x, wa, ba, wg, bg, wm, bm)

    # Fuse heads once at init (hoisted out of the per-call path).
    w_t, b_col = make_head_params(wa, ba, wg, bg, wm, bm)

    # f32 features: exercise both grid strategies so either auto-detected path
    # is validated regardless of TPU generation.
    for per_row in (False, True):
        age, gender, mask = custom_resnext_head(
            x, w_t, b_col, per_row_grid=per_row)
        jax.block_until_ready((age, gender, mask))
        assert age.shape == (B, 3) and gender.shape == (B, 2) and mask.shape == (B, 3)
        assert jnp.allclose(age, age_r, atol=2e-3, rtol=2e-3)
        assert jnp.allclose(gender, gender_r, atol=2e-3, rtol=2e-3)
        assert jnp.allclose(mask, mask_r, atol=2e-3, rtol=2e-3)

    # bf16 features (halves the only large HBM read); f32 accumulation in-kernel.
    x_bf16 = x.astype(jnp.bfloat16)
    age, gender, mask = custom_resnext_head(x_bf16, w_t, b_col)  # auto grid choice
    jax.block_until_ready((age, gender, mask))
    assert jnp.allclose(age, age_r, atol=3e-2, rtol=3e-2)
    assert jnp.allclose(gender, gender_r, atol=3e-2, rtol=3e-2)
    assert jnp.allclose(mask, mask_r, atol=3e-2, rtol=3e-2)

    print("KERNEL_OK")
</pallas_src>

<mosaic_0001>
module attributes {stable_mosaic.version = 11 : i64} {
  func.func @_head_kernel_batch(%arg0: i32, %arg1: memref<2x1536x144xf32, #tpu.memory_space<vmem>>, %arg2: memref<8x1536xf32, #tpu.memory_space<vmem>>, %arg3: memref<8x1xf32, #tpu.memory_space<vmem>>, %arg4: memref<8x2xf32, #tpu.memory_space<vmem>>) attributes {dimension_semantics = [#tpu.dimension_semantics<arbitrary>], iteration_bounds = array<i64: 1>, scalar_prefetch = 0 : i64, scratch_operands = 0 : i64, tpu.core_type = #tpu.core_type<tc>, window_params = [{pipeline_mode = #tpu.pipeline_mode<synchronous>, transform_indices = @transform_0, window_bounds = array<i64: 2, 1536, 144>}, {pipeline_mode = #tpu.pipeline_mode<synchronous>, transform_indices = @transform_1, window_bounds = array<i64: 8, 1536>}, {pipeline_mode = #tpu.pipeline_mode<synchronous>, transform_indices = @transform_2, window_bounds = array<i64: 8, 1>}, {pipeline_mode = #tpu.pipeline_mode<synchronous>, transform_indices = @transform_3, window_bounds = array<i64: 8, 2>}]} {
    %c0 = arith.constant 0 : index
    %c0_0 = arith.constant 0 : index
    %0 = vector.load %arg2[%c0, %c0_0] : memref<8x1536xf32, #tpu.memory_space<vmem>>, vector<8x1536xf32>
    %c0_1 = arith.constant 0 : index
    %c0_2 = arith.constant 0 : index
    %c0_3 = arith.constant 0 : index
    %1 = vector.load %arg1[%c0_1, %c0_2, %c0_3] : memref<2x1536x144xf32, #tpu.memory_space<vmem>>, vector<1x1536x144xf32>
    %2 = vector.shape_cast %1 : vector<1x1536x144xf32> to vector<1536x144xf32>
    %cst = arith.constant dense<0.000000e+00> : vector<8x144xf32>
    %3 = tpu.matmul %0, %2, %cst {dimension_numbers = #tpu.dot_dimension_numbers<[1], [0], [0], [1], [0, 0, 1, 1], [], []>} : vector<8x1536xf32>, vector<1536x144xf32>, vector<8x144xf32> -> vector<8x144xf32>
    %cst_4 = arith.constant dense<0.000000e+00> : vector<8xf32>
    %4 = vector.multi_reduction <add>, %3, %cst_4 [1] : vector<8x144xf32> to vector<8xf32>
    %5 = vector.shape_cast %4 : vector<8xf32> to vector<8x1xf32>
    %c1 = arith.constant 1 : index
    %c0_5 = arith.constant 0 : index
    %c0_6 = arith.constant 0 : index
    %6 = vector.load %arg1[%c1, %c0_5, %c0_6] : memref<2x1536x144xf32, #tpu.memory_space<vmem>>, vector<1x1536x144xf32>
    %7 = vector.shape_cast %6 : vector<1x1536x144xf32> to vector<1536x144xf32>
    %cst_7 = arith.constant dense<0.000000e+00> : vector<8x144xf32>
    %8 = tpu.matmul %0, %7, %cst_7 {dimension_numbers = #tpu.dot_dimension_numbers<[1], [0], [0], [1], [0, 0, 1, 1], [], []>} : vector<8x1536xf32>, vector<1536x144xf32>, vector<8x144xf32> -> vector<8x144xf32>
    %cst_8 = arith.constant dense<0.000000e+00> : vector<8xf32>
    %9 = vector.multi_reduction <add>, %8, %cst_8 [1] : vector<8x144xf32> to vector<8xf32>
    %10 = vector.shape_cast %9 : vector<8xf32> to vector<8x1xf32>
    %11 = tpu.concatenate %5, %10 in 1 : vector<8x1xf32>, vector<8x1xf32> -> vector<8x2xf32>
    %cst_9 = arith.constant 0.0069444445 : f32
    %12 = vector.broadcast %cst_9 : f32 to vector<8x2xf32>
    %13 = arith.mulf %11, %12 : vector<8x2xf32>
    %c0_10 = arith.constant 0 : index
    %c0_11 = arith.constant 0 : index
    %14 = vector.load %arg3[%c0_10, %c0_11] : memref<8x1xf32, #tpu.memory_space<vmem>>, vector<8x1xf32>
    %15 = vector.broadcast %14 : vector<8x1xf32> to vector<8x2xf32>
    %16 = arith.addf %13, %15 : vector<8x2xf32>
    %c0_12 = arith.constant 0 : index
    %c0_13 = arith.constant 0 : index
    %17 = vector.load %arg4[%c0_12, %c0_13] : memref<8x2xf32, #tpu.memory_space<vmem>>, vector<8x2xf32>
    tpu.vector_store %arg4[%c0_12, %c0_13], %16 {strides = array<i32>} : memref<8x2xf32, #tpu.memory_space<vmem>>, vector<8x2xf32>,
    return
  }
  func.func @transform_0(%arg0: i32) -> (i32, i32, i32) {
    %c0_i32 = arith.constant 0 : i32
    %c0_i32_0 = arith.constant 0 : i32
    %c0_i32_1 = arith.constant 0 : i32
    %c0_i32_2 = arith.constant 0 : i32
    return %c0_i32, %c0_i32_0, %c0_i32_1 : i32, i32, i32
  }
  func.func @transform_1(%arg0: i32) -> (i32, i32) {
    %c0_i32 = arith.constant 0 : i32
    %c0_i32_0 = arith.constant 0 : i32
    %c0_i32_1 = arith.constant 0 : i32
    return %c0_i32, %c0_i32_0 : i32, i32
  }
  func.func @transform_2(%arg0: i32) -> (i32, i32) {
    %c0_i32 = arith.constant 0 : i32
    %c0_i32_0 = arith.constant 0 : i32
    %c0_i32_1 = arith.constant 0 : i32
    return %c0_i32, %c0_i32_0 : i32, i32
  }
  func.func @transform_3(%arg0: i32) -> (i32, i32) {
    %c0_i32 = arith.constant 0 : i32
    %c0_i32_0 = arith.constant 0 : i32
    %c0_i32_1 = arith.constant 0 : i32
    return %c0_i32, %c0_i32_0 : i32, i32
  }
}

</mosaic_0001>

<llo_original>
// kernel: tpu_custom_call.1
$region0: #{tpu_custom_call.1}
  #allocation0 [shape = 'u32[]', space=smem, size = 0x4, offset = 0x4, fixed_abs, tag = 'smem constant byte address 0x4 - core index']
  #allocation1 [shape = 'u32[144,128]{1,0:T(1,128)}', space=vmem, size = 0x12000, scoped, tag = 'internal scratch']
  %s0 = inlined_call_operand.vmem [shape: f32[2,1536,144], index: 0, kind: input, shape index: {}]
  %s1 = inlined_call_operand.vmem [shape: f32[8,1536], index: 1, kind: input, shape index: {}]
  %s2 = inlined_call_operand.vmem [shape: f32[8,1], index: 2, kind: input, shape index: {}]
  %s3 = inlined_call_operand.vmem [shape: f32[8,2], index: 3, kind: output, shape index: {}]
  %s4 = sld [smem:[#allocation0]]
  $region22: #{tpu_custom_call.1} parent=0
    _
  %s6 = ssub.s32 1, %s4
  %s7 = scalar_select 0, %s6, %s4
  // Predicated region
  $region2: #{tpu_custom_call.1} parent=0 // pred_check
    _
  $region3: #{tpu_custom_call.1} parent=0 // pred_check_branch
    %9 = sbr.rel (0) target = $region5
  $region4: #{tpu_custom_call.1} parent=0 // pred_region
    _
  $region5: #{tpu_custom_call.1} parent=0 // pred_fallthru
    _
  // Predicated region
  $region6: #{tpu_custom_call.1} parent=0 // pred_check
    _
  $region7: #{tpu_custom_call.1} parent=0 // pred_check_branch
    %11 = sbr.rel (0) target = $region9
  $region8: #{tpu_custom_call.1} parent=0 // pred_region
    _
  $region9: #{tpu_custom_call.1} parent=0 // pred_fallthru
    _
  // Predicated region
  $region10: #{tpu_custom_call.1} parent=0 // pred_check
    _
  $region11: #{tpu_custom_call.1} parent=0 // pred_check_branch
    %13 = sbr.rel (0) target = $region13
  $region12: #{tpu_custom_call.1} parent=0 // pred_region
    _
  $region13: #{tpu_custom_call.1} parent=0 // pred_fallthru
    _
  %v14 = vld [vmem:[%s1] sm:$0xff]
  %v15 = vld [vmem:[%s1 + $0x8] sm:$0xff]
  %v16 = vld [vmem:[%s1 + $0x10] sm:$0xff]
  %v17 = vld [vmem:[%s1 + $0x18] sm:$0xff]
  %v18 = vld [vmem:[%s1 + $0x20] sm:$0xff]
  %v19 = vld [vmem:[%s1 + $0x28] sm:$0xff]
  %v20 = vld [vmem:[%s1 + $0x30] sm:$0xff]
  %v21 = vld [vmem:[%s1 + $0x38] sm:$0xff]
  %v22 = vld [vmem:[%s1 + $0x40] sm:$0xff]
  %v23 = vld [vmem:[%s1 + $0x48] sm:$0xff]
  %v24 = vld [vmem:[%s1 + $0x50] sm:$0xff]
  %v25 = vld [vmem:[%s1 + $0x58] sm:$0xff]
  %v26 = vld [vmem:[%s0] sm:$0xff]
  %v27 = vld [vmem:[%s0 + $0x8] sm:$0xff]
  %v28 = vld [vmem:[%s0 + $0x10] sm:$0xff]
  %v29 = vld [vmem:[%s0 + $0x18] sm:$0xff]
  %v30 = vld [vmem:[%s0 + $0x20] sm:$0xff]
  %v31 = vld [vmem:[%s0 + $0x28] sm:$0xff]
  %v32 = vld [vmem:[%s0 + $0x30] sm:$0xff]
  %v33 = vld [vmem:[%s0 + $0x38] sm:$0xff]
  %v34 = vld [vmem:[%s0 + $0x40] sm:$0xff]
  %v35 = vld [vmem:[%s0 + $0x48] sm:$0xff]
  %v36 = vld [vmem:[%s0 + $0x50] sm:$0xff]
  %v37 = vld [vmem:[%s0 + $0x58] sm:$0xff]
  %v38 = vld [vmem:[%s0 + $0x60] sm:$0xff]
  %v39 = vld [vmem:[%s0 + $0x68] sm:$0xff]
  %v40 = vld [vmem:[%s0 + $0x70] sm:$0xff]
  %v41 = vld [vmem:[%s0 + $0x78] sm:$0xff]
  %v42 = vld [vmem:[%s0 + $0x80] sm:$0xff]
  %v43 = vld [vmem:[%s0 + $0x88] sm:$0xff]
  %v44 = vld [vmem:[%s0 + $0x90] sm:$0xff]
  %v45 = vld [vmem:[%s0 + $0x98] sm:$0xff]
  %v46 = vld [vmem:[%s0 + $0xa0] sm:$0xff]
  %v47 = vld [vmem:[%s0 + $0xa8] sm:$0xff]
  %v48 = vld [vmem:[%s0 + $0xb0] sm:$0xff]
  %v49 = vld [vmem:[%s0 + $0xb8] sm:$0xff]
  %v50 = vld [vmem:[%s0 + $0xc0] sm:$0xff]
  %v51 = vld [vmem:[%s0 + $0xc8] sm:$0xff]
  %v52 = vld [vmem:[%s0 + $0xd0] sm:$0xff]
  %v53 = vld [vmem:[%s0 + $0xd8] sm:$0xff]
  %v54 = vld [vmem:[%s0 + $0xe0] sm:$0xff]
  %v55 = vld [vmem:[%s0 + $0xe8] sm:$0xff]
  %v56 = vld [vmem:[%s0 + $0xf0] sm:$0xff]
  %v57 = vld [vmem:[%s0 + $0xf8] sm:$0xff]
  %v58 = vld [vmem:[%s0 + $0x100] sm:$0xff]
  %v59 = vld [vmem:[%s0 + $0x108] sm:$0xff]
  %v60 = vld [vmem:[%s0 + $0x110] sm:$0xff]
  %v61 = vld [vmem:[%s0 + $0x118] sm:$0xff]
  %v62 = vld [vmem:[%s0 + $0x120] sm:$0xff]
  %v63 = vld [vmem:[%s0 + $0x128] sm:$0xff]
  %v64 = vld [vmem:[%s0 + $0x130] sm:$0xff]
  %v65 = vld [vmem:[%s0 + $0x138] sm:$0xff]
  %v66 = vld [vmem:[%s0 + $0x140] sm:$0xff]
  %v67 = vld [vmem:[%s0 + $0x148] sm:$0xff]
  %v68 = vld [vmem:[%s0 + $0x150] sm:$0xff]
  %v69 = vld [vmem:[%s0 + $0x158] sm:$0xff]
  %v70 = vld [vmem:[%s0 + $0x160] sm:$0xff]
  %v71 = vld [vmem:[%s0 + $0x168] sm:$0xff]
  %v72 = vld [vmem:[%s0 + $0x170] sm:$0xff]
  %v73 = vld [vmem:[%s0 + $0x178] sm:$0xff]
  %v74 = vld [vmem:[%s0 + $0x180] sm:$0xff]
  %v75 = vld [vmem:[%s0 + $0x188] sm:$0xff]
  %v76 = vld [vmem:[%s0 + $0x190] sm:$0xff]
  %v77 = vld [vmem:[%s0 + $0x198] sm:$0xff]
  %v78 = vld [vmem:[%s0 + $0x1a0] sm:$0xff]
  %v79 = vld [vmem:[%s0 + $0x1a8] sm:$0xff]
  %v80 = vld [vmem:[%s0 + $0x1b0] sm:$0xff]
  %v81 = vld [vmem:[%s0 + $0x1b8] sm:$0xff]
  %v82 = vld [vmem:[%s0 + $0x1c0] sm:$0xff]
  %v83 = vld [vmem:[%s0 + $0x1c8] sm:$0xff]
  %v84 = vld [vmem:[%s0 + $0x1d0] sm:$0xff]
  %v85 = vld [vmem:[%s0 + $0x1d8] sm:$0xff]
  %v86 = vld [vmem:[%s0 + $0x1e0] sm:$0xff]
  %v87 = vld [vmem:[%s0 + $0x1e8] sm:$0xff]
  %v88 = vld [vmem:[%s0 + $0x1f0] sm:$0xff]
  %v89 = vld [vmem:[%s0 + $0x1f8] sm:$0xff]
  %v90 = vld [vmem:[%s0 + $0x200] sm:$0xff]
  %v91 = vld [vmem:[%s0 + $0x208] sm:$0xff]
  %v92 = vld [vmem:[%s0 + $0x210] sm:$0xff]
  %v93 = vld [vmem:[%s0 + $0x218] sm:$0xff]
  %v94 = vld [vmem:[%s0 + $0x220] sm:$0xff]
  %v95 = vld [vmem:[%s0 + $0x228] sm:$0xff]
  %v96 = vld [vmem:[%s0 + $0x230] sm:$0xff]
  %v97 = vld [vmem:[%s0 + $0x238] sm:$0xff]
  %v98 = vld [vmem:[%s0 + $0x240] sm:$0xff]
  %v99 = vld [vmem:[%s0 + $0x248] sm:$0xff]
  %v100 = vld [vmem:[%s0 + $0x250] sm:$0xff]
  %v101 = vld [vmem:[%s0 + $0x258] sm:$0xff]
  %v102 = vld [vmem:[%s0 + $0x260] sm:$0xff]
  %v103 = vld [vmem:[%s0 + $0x268] sm:$0xff]
  %v104 = vld [vmem:[%s0 + $0x270] sm:$0xff]
  %v105 = vld [vmem:[%s0 + $0x278] sm:$0xff]
  %v106 = vld [vmem:[%s0 + $0x280] sm:$0xff]
  %v107 = vld [vmem:[%s0 + $0x288] sm:$0xff]
  %v108 = vld [vmem:[%s0 + $0x290] sm:$0xff]
  %v109 = vld [vmem:[%s0 + $0x298] sm:$0xff]
  %v110 = vld [vmem:[%s0 + $0x2a0] sm:$0xff]
  %v111 = vld [vmem:[%s0 + $0x2a8] sm:$0xff]
  %v112 = vld [vmem:[%s0 + $0x2b0] sm:$0xff]
  %v113 = vld [vmem:[%s0 + $0x2b8] sm:$0xff]
  %v114 = vld [vmem:[%s0 + $0x2c0] sm:$0xff]
  %v115 = vld [vmem:[%s0 + $0x2c8] sm:$0xff]
  %v116 = vld [vmem:[%s0 + $0x2d0] sm:$0xff]
  %v117 = vld [vmem:[%s0 + $0x2d8] sm:$0xff]
  %v118 = vld [vmem:[%s0 + $0x2e0] sm:$0xff]
  %v119 = vld [vmem:[%s0 + $0x2e8] sm:$0xff]
  %v120 = vld [vmem:[%s0 + $0x2f0] sm:$0xff]
  %v121 = vld [vmem:[%s0 + $0x2f8] sm:$0xff]
  %v122 = vld [vmem:[%s0 + $0x300] sm:$0xff]
  %v123 = vld [vmem:[%s0 + $0x308] sm:$0xff]
  %v124 = vld [vmem:[%s0 + $0x310] sm:$0xff]
  %v125 = vld [vmem:[%s0 + $0x318] sm:$0xff]
  %v126 = vld [vmem:[%s0 + $0x320] sm:$0xff]
  %v127 = vld [vmem:[%s0 + $0x328] sm:$0xff]
  %v128 = vld [vmem:[%s0 + $0x330] sm:$0xff]
  %v129 = vld [vmem:[%s0 + $0x338] sm:$0xff]
  %v130 = vld [vmem:[%s0 + $0x340] sm:$0xff]
  %v131 = vld [vmem:[%s0 + $0x348] sm:$0xff]
  %v132 = vld [vmem:[%s0 + $0x350] sm:$0xff]
  %v133 = vld [vmem:[%s0 + $0x358] sm:$0xff]
  %v134 = vld [vmem:[%s0 + $0x360] sm:$0xff]
  %v135 = vld [vmem:[%s0 + $0x368] sm:$0xff]
  %v136 = vld [vmem:[%s0 + $0x370] sm:$0xff]
  %v137 = vld [vmem:[%s0 + $0x378] sm:$0xff]
  %v138 = vld [vmem:[%s0 + $0x380] sm:$0xff]
  %v139 = vld [vmem:[%s0 + $0x388] sm:$0xff]
  %v140 = vld [vmem:[%s0 + $0x390] sm:$0xff]
  %v141 = vld [vmem:[%s0 + $0x398] sm:$0xff]
  %v142 = vld [vmem:[%s0 + $0x3a0] sm:$0xff]
  %v143 = vld [vmem:[%s0 + $0x3a8] sm:$0xff]
  %v144 = vld [vmem:[%s0 + $0x3b0] sm:$0xff]
  %v145 = vld [vmem:[%s0 + $0x3b8] sm:$0xff]
  %v146 = vld [vmem:[%s0 + $0x3c0] sm:$0xff]
  %v147 = vld [vmem:[%s0 + $0x3c8] sm:$0xff]
  %v148 = vld [vmem:[%s0 + $0x3d0] sm:$0xff]
  %v149 = vld [vmem:[%s0 + $0x3d8] sm:$0xff]
  %v150 = vld [vmem:[%s0 + $0x3e0] sm:$0xff]
  %v151 = vld [vmem:[%s0 + $0x3e8] sm:$0xff]
  %v152 = vld [vmem:[%s0 + $0x3f0] sm:$0xff]
  %v153 = vld [vmem:[%s0 + $0x3f8] sm:$0xff]
  %v154 = vld [vmem:[%s0 + $0x400] sm:$0xff]
  %v155 = vld [vmem:[%s0 + $0x408] sm:$0xff]
  %v156 = vld [vmem:[%s0 + $0x410] sm:$0xff]
  %v157 = vld [vmem:[%s0 + $0x418] sm:$0xff]
  %v158 = vld [vmem:[%s0 + $0x420] sm:$0xff]
  %v159 = vld [vmem:[%s0 + $0x428] sm:$0xff]
  %v160 = vld [vmem:[%s0 + $0x430] sm:$0xff]
  %v161 = vld [vmem:[%s0 + $0x438] sm:$0xff]
  %v162 = vld [vmem:[%s0 + $0x440] sm:$0xff]
  %v163 = vld [vmem:[%s0 + $0x448] sm:$0xff]
  %v164 = vld [vmem:[%s0 + $0x450] sm:$0xff]
  %v165 = vld [vmem:[%s0 + $0x458] sm:$0xff]
  %v166 = vld [vmem:[%s0 + $0x460] sm:$0xff]
  %v167 = vld [vmem:[%s0 + $0x468] sm:$0xff]
  %v168 = vld [vmem:[%s0 + $0x470] sm:$0xff]
  %v169 = vld [vmem:[%s0 + $0x478] sm:$0xff]
  %v170 = vld [vmem:[%s0 + $0x480] sm:$0xff]
  %v171 = vld [vmem:[%s0 + $0x488] sm:$0xff]
  %v172 = vld [vmem:[%s0 + $0x490] sm:$0xff]
  %v173 = vld [vmem:[%s0 + $0x498] sm:$0xff]
  %v174 = vld [vmem:[%s0 + $0x4a0] sm:$0xff]
  %v175 = vld [vmem:[%s0 + $0x4a8] sm:$0xff]
  %v176 = vld [vmem:[%s0 + $0x4b0] sm:$0xff]
  %v177 = vld [vmem:[%s0 + $0x4b8] sm:$0xff]
  %v178 = vld [vmem:[%s0 + $0x4c0] sm:$0xff]
  %v179 = vld [vmem:[%s0 + $0x4c8] sm:$0xff]
  %v180 = vld [vmem:[%s0 + $0x4d0] sm:$0xff]
  %v181 = vld [vmem:[%s0 + $0x4d8] sm:$0xff]
  %v182 = vld [vmem:[%s0 + $0x4e0] sm:$0xff]
  %v183 = vld [vmem:[%s0 + $0x4e8] sm:$0xff]
  %v184 = vld [vmem:[%s0 + $0x4f0] sm:$0xff]
  %v185 = vld [vmem:[%s0 + $0x4f8] sm:$0xff]
  %v186 = vld [vmem:[%s0 + $0x500] sm:$0xff]
  %v187 = vld [vmem:[%s0 + $0x508] sm:$0xff]
  %v188 = vld [vmem:[%s0 + $0x510] sm:$0xff]
  %v189 = vld [vmem:[%s0 + $0x518] sm:$0xff]
  %v190 = vld [vmem:[%s0 + $0x520] sm:$0xff]
  %v191 = vld [vmem:[%s0 + $0x528] sm:$0xff]
  %v192 = vld [vmem:[%s0 + $0x530] sm:$0xff]
  %v193 = vld [vmem:[%s0 + $0x538] sm:$0xff]
  %v194 = vld [vmem:[%s0 + $0x540] sm:$0xff]
  %v195 = vld [vmem:[%s0 + $0x548] sm:$0xff]
  %v196 = vld [vmem:[%s0 + $0x550] sm:$0xff]
  %v197 = vld [vmem:[%s0 + $0x558] sm:$0xff]
  %v198 = vld [vmem:[%s0 + $0x560] sm:$0xff]
  %v199 = vld [vmem:[%s0 + $0x568] sm:$0xff]
  %v200 = vld [vmem:[%s0 + $0x570] sm:$0xff]
  %v201 = vld [vmem:[%s0 + $0x578] sm:$0xff]
  %v202 = vld [vmem:[%s0 + $0x580] sm:$0xff]
  %v203 = vld [vmem:[%s0 + $0x588] sm:$0xff]
  %v204 = vld [vmem:[%s0 + $0x590] sm:$0xff]
  %v205 = vld [vmem:[%s0 + $0x598] sm:$0xff]
  %v206 = vld [vmem:[%s0 + $0x5a0] sm:$0xff]
  %v207 = vld [vmem:[%s0 + $0x5a8] sm:$0xff]
  %v208 = vld [vmem:[%s0 + $0x5b0] sm:$0xff]
  %v209 = vld [vmem:[%s0 + $0x5b8] sm:$0xff]
  %v210 = vld [vmem:[%s0 + $0x5c0] sm:$0xff]
  %v211 = vld [vmem:[%s0 + $0x5c8] sm:$0xff]
  %v212 = vld [vmem:[%s0 + $0x5d0] sm:$0xff]
  %v213 = vld [vmem:[%s0 + $0x5d8] sm:$0xff]
  %v214 = vld [vmem:[%s0 + $0x5e0] sm:$0xff]
  %v215 = vld [vmem:[%s0 + $0x5e8] sm:$0xff]
  %v216 = vld [vmem:[%s0 + $0x5f0] sm:$0xff]
  %v217 = vld [vmem:[%s0 + $0x5f8] sm:$0xff]
  %v218 = vld [vmem:[%s0 + $0x600] sm:$0xff]
  %v219 = vld [vmem:[%s0 + $0x608] sm:$0xff]
  %v220 = vld [vmem:[%s0 + $0x610] sm:$0xff]
  %v221 = vld [vmem:[%s0 + $0x618] sm:$0xff]
  %v222 = vld [vmem:[%s0 + $0x620] sm:$0xff]
  %v223 = vld [vmem:[%s0 + $0x628] sm:$0xff]
  %v224 = vld [vmem:[%s0 + $0x630] sm:$0xff]
  %v225 = vld [vmem:[%s0 + $0x638] sm:$0xff]
  %v226 = vld [vmem:[%s0 + $0x640] sm:$0xff]
  %v227 = vld [vmem:[%s0 + $0x648] sm:$0xff]
  %v228 = vld [vmem:[%s0 + $0x650] sm:$0xff]
  %v229 = vld [vmem:[%s0 + $0x658] sm:$0xff]
  %v230 = vld [vmem:[%s0 + $0x660] sm:$0xff]
  %v231 = vld [vmem:[%s0 + $0x668] sm:$0xff]
  %v232 = vld [vmem:[%s0 + $0x670] sm:$0xff]
  %v233 = vld [vmem:[%s0 + $0x678] sm:$0xff]
  %v234 = vld [vmem:[%s0 + $0x680] sm:$0xff]
  %v235 = vld [vmem:[%s0 + $0x688] sm:$0xff]
  %v236 = vld [vmem:[%s0 + $0x690] sm:$0xff]
  %v237 = vld [vmem:[%s0 + $0x698] sm:$0xff]
  %v238 = vld [vmem:[%s0 + $0x6a0] sm:$0xff]
  %v239 = vld [vmem:[%s0 + $0x6a8] sm:$0xff]
  %v240 = vld [vmem:[%s0 + $0x6b0] sm:$0xff]
  %v241 = vld [vmem:[%s0 + $0x6b8] sm:$0xff]
  %v242 = vld [vmem:[%s0 + $0x6c0] sm:$0xff]
  %v243 = vld [vmem:[%s0 + $0x6c8] sm:$0xff]
  %v244 = vld [vmem:[%s0 + $0x6d0] sm:$0xff]
  %v245 = vld [vmem:[%s0 + $0x6d8] sm:$0xff]
  %v246 = vld [vmem:[%s0 + $0x6e0] sm:$0xff]
  %v247 = vld [vmem:[%s0 + $0x6e8] sm:$0xff]
  %v248 = vld [vmem:[%s0 + $0x6f0] sm:$0xff]
  %v249 = vld [vmem:[%s0 + $0x6f8] sm:$0xff]
  %v250 = vld [vmem:[%s0 + $0x700] sm:$0xff]
  %v251 = vld [vmem:[%s0 + $0x708] sm:$0xff]
  %v252 = vld [vmem:[%s0 + $0x710] sm:$0xff]
  %v253 = vld [vmem:[%s0 + $0x718] sm:$0xff]
  %v254 = vld [vmem:[%s0 + $0x720] sm:$0xff]
  %v255 = vld [vmem:[%s0 + $0x728] sm:$0xff]
  %v256 = vld [vmem:[%s0 + $0x730] sm:$0xff]
  %v257 = vld [vmem:[%s0 + $0x738] sm:$0xff]
  %v258 = vld [vmem:[%s0 + $0x740] sm:$0xff]
  %v259 = vld [vmem:[%s0 + $0x748] sm:$0xff]
  %v260 = vld [vmem:[%s0 + $0x750] sm:$0xff]
  %v261 = vld [vmem:[%s0 + $0x758] sm:$0xff]
  %v262 = vld [vmem:[%s0 + $0x760] sm:$0xff]
  %v263 = vld [vmem:[%s0 + $0x768] sm:$0xff]
  %v264 = vld [vmem:[%s0 + $0x770] sm:$0xff]
  %v265 = vld [vmem:[%s0 + $0x778] sm:$0xff]
  %v266 = vld [vmem:[%s0 + $0x780] sm:$0xff]
  %v267 = vld [vmem:[%s0 + $0x788] sm:$0xff]
  %v268 = vld [vmem:[%s0 + $0x790] sm:$0xff]
  %v269 = vld [vmem:[%s0 + $0x798] sm:$0xff]
  %v270 = vld [vmem:[%s0 + $0x7a0] sm:$0xff]
  %v271 = vld [vmem:[%s0 + $0x7a8] sm:$0xff]
  %v272 = vld [vmem:[%s0 + $0x7b0] sm:$0xff]
  %v273 = vld [vmem:[%s0 + $0x7b8] sm:$0xff]
  %v274 = vld [vmem:[%s0 + $0x7c0] sm:$0xff]
  %v275 = vld [vmem:[%s0 + $0x7c8] sm:$0xff]
  %v276 = vld [vmem:[%s0 + $0x7d0] sm:$0xff]
  %v277 = vld [vmem:[%s0 + $0x7d8] sm:$0xff]
  %v278 = vld [vmem:[%s0 + $0x7e0] sm:$0xff]
  %v279 = vld [vmem:[%s0 + $0x7e8] sm:$0xff]
  %v280 = vld [vmem:[%s0 + $0x7f0] sm:$0xff]
  %v281 = vld [vmem:[%s0 + $0x7f8] sm:$0xff]
  %v282 = vld [vmem:[%s0 + $0x800] sm:$0xff]
  %v283 = vld [vmem:[%s0 + $0x808] sm:$0xff]
  %v284 = vld [vmem:[%s0 + $0x810] sm:$0xff]
  %v285 = vld [vmem:[%s0 + $0x818] sm:$0xff]
  %v286 = vld [vmem:[%s0 + $0x820] sm:$0xff]
  %v287 = vld [vmem:[%s0 + $0x828] sm:$0xff]
  %v288 = vld [vmem:[%s0 + $0x830] sm:$0xff]
  %v289 = vld [vmem:[%s0 + $0x838] sm:$0xff]
  %v290 = vld [vmem:[%s0 + $0x840] sm:$0xff]
  %v291 = vld [vmem:[%s0 + $0x848] sm:$0xff]
  %v292 = vld [vmem:[%s0 + $0x850] sm:$0xff]
  %v293 = vld [vmem:[%s0 + $0x858] sm:$0xff]
  %v294 = vld [vmem:[%s0 + $0x860] sm:$0xff]
  %v295 = vld [vmem:[%s0 + $0x868] sm:$0xff]
  %v296 = vld [vmem:[%s0 + $0x870] sm:$0xff]
  %v297 = vld [vmem:[%s0 + $0x878] sm:$0xff]
  %v298 = vld [vmem:[%s0 + $0x880] sm:$0xff]
  %v299 = vld [vmem:[%s0 + $0x888] sm:$0xff]
  %v300 = vld [vmem:[%s0 + $0x890] sm:$0xff]
  %v301 = vld [vmem:[%s0 + $0x898] sm:$0xff]
  %v302 = vld [vmem:[%s0 + $0x8a0] sm:$0xff]
  %v303 = vld [vmem:[%s0 + $0x8a8] sm:$0xff]
  %v304 = vld [vmem:[%s0 + $0x8b0] sm:$0xff]
  %v305 = vld [vmem:[%s0 + $0x8b8] sm:$0xff]
  %v306 = vld [vmem:[%s0 + $0x8c0] sm:$0xff]
  %v307 = vld [vmem:[%s0 + $0x8c8] sm:$0xff]
  %v308 = vld [vmem:[%s0 + $0x8d0] sm:$0xff]
  %v309 = vld [vmem:[%s0 + $0x8d8] sm:$0xff]
  %v310 = vld [vmem:[%s0 + $0x8e0] sm:$0xff]
  %v311 = vld [vmem:[%s0 + $0x8e8] sm:$0xff]
  %v312 = vld [vmem:[%s0 + $0x8f0] sm:$0xff]
  %v313 = vld [vmem:[%s0 + $0x8f8] sm:$0xff]
  %v314 = vld [vmem:[%s0 + $0x900] sm:$0xff]
  %v315 = vld [vmem:[%s0 + $0x908] sm:$0xff]
  %v316 = vld [vmem:[%s0 + $0x910] sm:$0xff]
  %v317 = vld [vmem:[%s0 + $0x918] sm:$0xff]
  %v318 = vld [vmem:[%s0 + $0x920] sm:$0xff]
  %v319 = vld [vmem:[%s0 + $0x928] sm:$0xff]
  %v320 = vld [vmem:[%s0 + $0x930] sm:$0xff]
  %v321 = vld [vmem:[%s0 + $0x938] sm:$0xff]
  %v322 = vld [vmem:[%s0 + $0x940] sm:$0xff]
  %v323 = vld [vmem:[%s0 + $0x948] sm:$0xff]
  %v324 = vld [vmem:[%s0 + $0x950] sm:$0xff]
  %v325 = vld [vmem:[%s0 + $0x958] sm:$0xff]
  %v326 = vld [vmem:[%s0 + $0x960] sm:$0xff]
  %v327 = vld [vmem:[%s0 + $0x968] sm:$0xff]
  %v328 = vld [vmem:[%s0 + $0x970] sm:$0xff]
  %v329 = vld [vmem:[%s0 + $0x978] sm:$0xff]
  %v330 = vld [vmem:[%s0 + $0x980] sm:$0xff]
  %v331 = vld [vmem:[%s0 + $0x988] sm:$0xff]
  %v332 = vld [vmem:[%s0 + $0x990] sm:$0xff]
  %v333 = vld [vmem:[%s0 + $0x998] sm:$0xff]
  %v334 = vld [vmem:[%s0 + $0x9a0] sm:$0xff]
  %v335 = vld [vmem:[%s0 + $0x9a8] sm:$0xff]
  %v336 = vld [vmem:[%s0 + $0x9b0] sm:$0xff]
  %v337 = vld [vmem:[%s0 + $0x9b8] sm:$0xff]
  %v338 = vld [vmem:[%s0 + $0x9c0] sm:$0xff]
  %v339 = vld [vmem:[%s0 + $0x9c8] sm:$0xff]
  %v340 = vld [vmem:[%s0 + $0x9d0] sm:$0xff]
  %v341 = vld [vmem:[%s0 + $0x9d8] sm:$0xff]
  %v342 = vld [vmem:[%s0 + $0x9e0] sm:$0xff]
  %v343 = vld [vmem:[%s0 + $0x9e8] sm:$0xff]
  %v344 = vld [vmem:[%s0 + $0x9f0] sm:$0xff]
  %v345 = vld [vmem:[%s0 + $0x9f8] sm:$0xff]
  %v346 = vld [vmem:[%s0 + $0xa00] sm:$0xff]
  %v347 = vld [vmem:[%s0 + $0xa08] sm:$0xff]
  %v348 = vld [vmem:[%s0 + $0xa10] sm:$0xff]
  %v349 = vld [vmem:[%s0 + $0xa18] sm:$0xff]
  %v350 = vld [vmem:[%s0 + $0xa20] sm:$0xff]
  %v351 = vld [vmem:[%s0 + $0xa28] sm:$0xff]
  %v352 = vld [vmem:[%s0 + $0xa30] sm:$0xff]
  %v353 = vld [vmem:[%s0 + $0xa38] sm:$0xff]
  %v354 = vld [vmem:[%s0 + $0xa40] sm:$0xff]
  %v355 = vld [vmem:[%s0 + $0xa48] sm:$0xff]
  %v356 = vld [vmem:[%s0 + $0xa50] sm:$0xff]
  %v357 = vld [vmem:[%s0 + $0xa58] sm:$0xff]
  %v358 = vld [vmem:[%s0 + $0xa60] sm:$0xff]
  %v359 = vld [vmem:[%s0 + $0xa68] sm:$0xff]
  %v360 = vld [vmem:[%s0 + $0xa70] sm:$0xff]
  %v361 = vld [vmem:[%s0 + $0xa78] sm:$0xff]
  %v362 = vld [vmem:[%s0 + $0xa80] sm:$0xff]
  %v363 = vld [vmem:[%s0 + $0xa88] sm:$0xff]
  %v364 = vld [vmem:[%s0 + $0xa90] sm:$0xff]
  %v365 = vld [vmem:[%s0 + $0xa98] sm:$0xff]
  %v366 = vld [vmem:[%s0 + $0xaa0] sm:$0xff]
  %v367 = vld [vmem:[%s0 + $0xaa8] sm:$0xff]
  %v368 = vld [vmem:[%s0 + $0xab0] sm:$0xff]
  %v369 = vld [vmem:[%s0 + $0xab8] sm:$0xff]
  %v370 = vld [vmem:[%s0 + $0xac0] sm:$0xff]
  %v371 = vld [vmem:[%s0 + $0xac8] sm:$0xff]
  %v372 = vld [vmem:[%s0 + $0xad0] sm:$0xff]
  %v373 = vld [vmem:[%s0 + $0xad8] sm:$0xff]
  %v374 = vld [vmem:[%s0 + $0xae0] sm:$0xff]
  %v375 = vld [vmem:[%s0 + $0xae8] sm:$0xff]
  %v376 = vld [vmem:[%s0 + $0xaf0] sm:$0xff]
  %v377 = vld [vmem:[%s0 + $0xaf8] sm:$0xff]
  %v378 = vld [vmem:[%s0 + $0xb00] sm:$0xff]
  %v379 = vld [vmem:[%s0 + $0xb08] sm:$0xff]
  %v380 = vld [vmem:[%s0 + $0xb10] sm:$0xff]
  %v381 = vld [vmem:[%s0 + $0xb18] sm:$0xff]
  %v382 = vld [vmem:[%s0 + $0xb20] sm:$0xff]
  %v383 = vld [vmem:[%s0 + $0xb28] sm:$0xff]
  %v384 = vld [vmem:[%s0 + $0xb30] sm:$0xff]
  %v385 = vld [vmem:[%s0 + $0xb38] sm:$0xff]
  %v386 = vld [vmem:[%s0 + $0xb40] sm:$0xff]
  %v387 = vld [vmem:[%s0 + $0xb48] sm:$0xff]
  %v388 = vld [vmem:[%s0 + $0xb50] sm:$0xff]
  %v389 = vld [vmem:[%s0 + $0xb58] sm:$0xff]
  %v390 = vld [vmem:[%s0 + $0xb60] sm:$0xff]
  %v391 = vld [vmem:[%s0 + $0xb68] sm:$0xff]
  %v392 = vld [vmem:[%s0 + $0xb70] sm:$0xff]
  %v393 = vld [vmem:[%s0 + $0xb78] sm:$0xff]
  %v394 = vld [vmem:[%s0 + $0xb80] sm:$0xff]
  %v395 = vld [vmem:[%s0 + $0xb88] sm:$0xff]
  %v396 = vld [vmem:[%s0 + $0xb90] sm:$0xff]
  %v397 = vld [vmem:[%s0 + $0xb98] sm:$0xff]
  %v398 = vld [vmem:[%s0 + $0xba0] sm:$0xff]
  %v399 = vld [vmem:[%s0 + $0xba8] sm:$0xff]
  %v400 = vld [vmem:[%s0 + $0xbb0] sm:$0xff]
  %v401 = vld [vmem:[%s0 + $0xbb8] sm:$0xff]
  %v402 = vld [vmem:[%s0 + $0xbc0] sm:$0xff]
  %v403 = vld [vmem:[%s0 + $0xbc8] sm:$0xff]
  %v404 = vld [vmem:[%s0 + $0xbd0] sm:$0xff]
  %v405 = vld [vmem:[%s0 + $0xbd8] sm:$0xff]
  %v406 = vld [vmem:[%s0 + $0xbe0] sm:$0xff]
  %v407 = vld [vmem:[%s0 + $0xbe8] sm:$0xff]
  %v408 = vld [vmem:[%s0 + $0xbf0] sm:$0xff]
  %v409 = vld [vmem:[%s0 + $0xbf8] sm:$0xff]
  %410 = vmatprep.subr.mxu0 %v27
  %411 = vmatpush1.msra.mxu0 %v26
  %412 = vmatprep.subr.mxu0 %v29
  %413 = vmatpush1.msra.mxu0 %v28
  %414 = vmatprep.subr.mxu0 %v31
  %415 = vmatpush1.msra.mxu0 %v30
  %416 = vmatprep.subr.mxu0 %v33
  %417 = vmatpush1.msra.mxu0 %v32
  %418 = vmatprep.subr.mxu0 %v35
  %419 = vmatpush1.msra.mxu0 %v34
  %420 = vmatprep.subr.mxu0 %v37
  %421 = vmatpush1.msra.mxu0 %v36
  %422 = vmatprep.subr.mxu0 %v39
  %423 = vmatpush1.msra.mxu0 %v38
  %424 = vmatprep.subr.mxu0 %v41
  %425 = vmatpush1.msra.mxu0 %v40
  %426 = vmatprep.subr.mxu0 %v43
  %427 = vmatpush1.msra.mxu0 %v42
  %428 = vmatprep.subr.mxu0 %v45
  %429 = vmatpush1.msra.mxu0 %v44
  %430 = vmatprep.subr.mxu0 %v47
  %431 = vmatpush1.msra.mxu0 %v46
  %432 = vmatprep.subr.mxu0 %v49
  %433 = vmatpush1.msra.mxu0 %v48
  %434 = vmatprep.subr.mxu0 %v51
  %435 = vmatpush1.msra.mxu0 %v50
  %436 = vmatprep.subr.mxu0 %v53
  %437 = vmatpush1.msra.mxu0 %v52
  %438 = vmatprep.subr.mxu0 %v55
  %439 = vmatpush1.msra.mxu0 %v54
  %440 = vmatprep.subr.mxu0 %v57
  %441 = vmatpush1.msra.mxu0 %v56
  %442 = vmatprep.subr.mxu0 %v59
  %443 = vmatpush1.msra.mxu0 %v58
  %444 = vmatprep.subr.mxu0 %v61
  %445 = vmatpush1.msra.mxu0 %v60
  %446 = vmatprep.subr.mxu0 %v63
  %447 = vmatpush1.msra.mxu0 %v62
  %448 = vmatprep.subr.mxu0 %v65
  %449 = vmatpush1.msra.mxu0 %v64
  %450 = vmatprep.subr.mxu0 %v67
  %451 = vmatpush1.msra.mxu0 %v66
  %452 = vmatprep.subr.mxu0 %v69
  %453 = vmatpush1.msra.mxu0 %v68
  %454 = vmatprep.subr.mxu0 %v71
  %455 = vmatpush1.msra.mxu0 %v70
  %456 = vmatprep.subr.mxu0 %v73
  %457 = vmatpush1.msra.mxu0 %v72
  %458 = vmatprep.subr.mxu0 %v75
  %459 = vmatpush1.msra.mxu0 %v74
  %460 = vmatprep.subr.mxu0 %v77
  %461 = vmatpush1.msra.mxu0 %v76
  %462 = vmatprep.subr.mxu0 %v79
  %463 = vmatpush1.msra.mxu0 %v78
  %464 = vmatprep.subr.mxu0 %v81
  %465 = vmatpush1.msra.mxu0 %v80
  %466 = vmatprep.subr.mxu0 %v83
  %467 = vmatpush1.msra.mxu0 %v82
  %468 = vmatprep.subr.mxu0 %v85
  %469 = vmatpush1.msra.mxu0 %v84
  %470 = vmatprep.subr.mxu0 %v87
  %471 = vmatpush1.msra.mxu0 %v86
  %472 = vmatprep.subr.mxu0 %v89
  %473 = vmatpush1.msra.mxu0 %v88
  %474 = vmatprep.mubr.f32.mxu0 %v15
  %475 = vmatmul.mubr.f32.gmra.mrb[0].mxu0 %v14
  %v476 = vpop.f32.mrb[0].mxu0
  %v477 = vadd.f32 0.0, %v476
  %v478 = vpop.f32.mrb[0].mxu0
  %v479 = vadd.f32 0.0, %v478
  %480 = vdwg.mxu0
  %481 = vmatprep.subr.mxu0 %v91
  %482 = vmatpush1.msra.mxu0 %v90
  %483 = vmatprep.subr.mxu0 %v93
  %484 = vmatpush1.msra.mxu0 %v92
  %485 = vmatprep.subr.mxu0 %v95
  %486 = vmatpush1.msra.mxu0 %v94
  %487 = vmatprep.subr.mxu0 %v97
  %488 = vmatpush1.msra.mxu0 %v96
  %489 = vmatprep.subr.mxu0 %v99
  %490 = vmatpush1.msra.mxu0 %v98
  %491 = vmatprep.subr.mxu0 %v101
  %492 = vmatpush1.msra.mxu0 %v100
  %493 = vmatprep.subr.mxu0 %v103
  %494 = vmatpush1.msra.mxu0 %v102
  %495 = vmatprep.subr.mxu0 %v105
  %496 = vmatpush1.msra.mxu0 %v104
  %497 = vmatprep.subr.mxu0 %v107
  %498 = vmatpush1.msra.mxu0 %v106
  %499 = vmatprep.subr.mxu0 %v109
  %500 = vmatpush1.msra.mxu0 %v108
  %501 = vmatprep.subr.mxu0 %v111
  %502 = vmatpush1.msra.mxu0 %v110
  %503 = vmatprep.subr.mxu0 %v113
  %504 = vmatpush1.msra.mxu0 %v112
  %505 = vmatprep.subr.mxu0 %v115
  %506 = vmatpush1.msra.mxu0 %v114
  %507 = vmatprep.subr.mxu0 %v117
  %508 = vmatpush1.msra.mxu0 %v116
  %509 = vmatprep.subr.mxu0 %v119
  %510 = vmatpush1.msra.mxu0 %v118
  %511 = vmatprep.subr.mxu0 %v121
  %512 = vmatpush1.msra.mxu0 %v120
  %513 = vmatprep.subr.mxu0 %v123
  %514 = vmatpush1.msra.mxu0 %v122
  %515 = vmatprep.subr.mxu0 %v125
  %516 = vmatpush1.msra.mxu0 %v124
  %517 = vmatprep.subr.mxu0 %v127
  %518 = vmatpush1.msra.mxu0 %v126
  %519 = vmatprep.subr.mxu0 %v129
  %520 = vmatpush1.msra.mxu0 %v128
  %521 = vmatprep.subr.mxu0 %v131
  %522 = vmatpush1.msra.mxu0 %v130
  %523 = vmatprep.subr.mxu0 %v133
  %524 = vmatpush1.msra.mxu0 %v132
  %525 = vmatprep.subr.mxu0 %v135
  %526 = vmatpush1.msra.mxu0 %v134
  %527 = vmatprep.subr.mxu0 %v137
  %528 = vmatpush1.msra.mxu0 %v136
  %529 = vmatprep.subr.mxu0 %v139
  %530 = vmatpush1.msra.mxu0 %v138
  %531 = vmatprep.subr.mxu0 %v141
  %532 = vmatpush1.msra.mxu0 %v140
  %533 = vmatprep.subr.mxu0 %v143
  %534 = vmatpush1.msra.mxu0 %v142
  %535 = vmatprep.subr.mxu0 %v145
  %536 = vmatpush1.msra.mxu0 %v144
  %537 = vmatprep.subr.mxu0 %v147
  %538 = vmatpush1.msra.mxu0 %v146
  %539 = vmatprep.subr.mxu0 %v149
  %540 = vmatpush1.msra.mxu0 %v148
  %541 = vmatprep.subr.mxu0 %v151
  %542 = vmatpush1.msra.mxu0 %v150
  %543 = vmatprep.subr.mxu0 %v153
  %544 = vmatpush1.msra.mxu0 %v152
  %545 = vmatprep.mubr.f32.mxu0 %v17
  %546 = vmatmul.mubr.f32.gmra.mrb[0].mxu0 %v16
  %v547 = vpop.f32.mrb[0].mxu0
  %v548 = vadd.f32 %v477, %v547
  %v549 = vpop.f32.mrb[0].mxu0
  %v550 = vadd.f32 %v479, %v549
  %551 = vdwg.mxu0
  %552 = vmatprep.subr.mxu0 %v155
  %553 = vmatpush1.msra.mxu0 %v154
  %554 = vmatprep.subr.mxu0 %v157
  %555 = vmatpush1.msra.mxu0 %v156
  %556 = vmatprep.subr.mxu0 %v159
  %557 = vmatpush1.msra.mxu0 %v158
  %558 = vmatprep.subr.mxu0 %v161
  %559 = vmatpush1.msra.mxu0 %v160
  %560 = vmatprep.subr.mxu0 %v163
  %561 = vmatpush1.msra.mxu0 %v162
  %562 = vmatprep.subr.mxu0 %v165
  %563 = vmatpush1.msra.mxu0 %v164
  %564 = vmatprep.subr.mxu0 %v167
  %565 = vmatpush1.msra.mxu0 %v166
  %566 = vmatprep.subr.mxu0 %v169
  %567 = vmatpush1.msra.mxu0 %v168
  %568 = vmatprep.subr.mxu0 %v171
  %569 = vmatpush1.msra.mxu0 %v170
  %570 = vmatprep.subr.mxu0 %v173
  %571 = vmatpush1.msra.mxu0 %v172
  %572 = vmatprep.subr.mxu0 %v175
  %573 = vmatpush1.msra.mxu0 %v174
  %574 = vmatprep.subr.mxu0 %v177
  %575 = vmatpush1.msra.mxu0 %v176
  %576 = vmatprep.subr.mxu0 %v179
  %577 = vmatpush1.msra.mxu0 %v178
  %578 = vmatprep.subr.mxu0 %v181
  %579 = vmatpush1.msra.mxu0 %v180
  %580 = vmatprep.subr.mxu0 %v183
  %581 = vmatpush1.msra.mxu0 %v182
  %582 = vmatprep.subr.mxu0 %v185
  %583 = vmatpush1.msra.mxu0 %v184
  %584 = vmatprep.subr.mxu0 %v187
  %585 = vmatpush1.msra.mxu0 %v186
  %586 = vmatprep.subr.mxu0 %v189
  %587 = vmatpush1.msra.mxu0 %v188
  %588 = vmatprep.subr.mxu0 %v191
  %589 = vmatpush1.msra.mxu0 %v190
  %590 = vmatprep.subr.mxu0 %v193
  %591 = vmatpush1.msra.mxu0 %v192
  %592 = vmatprep.subr.mxu0 %v195
  %593 = vmatpush1.msra.mxu0 %v194
  %594 = vmatprep.subr.mxu0 %v197
  %595 = vmatpush1.msra.mxu0 %v196
  %596 = vmatprep.subr.mxu0 %v199
  %597 = vmatpush1.msra.mxu0 %v198
  %598 = vmatprep.subr.mxu0 %v201
  %599 = vmatpush1.msra.mxu0 %v200
  %600 = vmatprep.subr.mxu0 %v203
  %601 = vmatpush1.msra.mxu0 %v202
  %602 = vmatprep.subr.mxu0 %v205
  %603 = vmatpush1.msra.mxu0 %v204
  %604 = vmatprep.subr.mxu0 %v207
  %605 = vmatpush1.msra.mxu0 %v206
  %606 = vmatprep.subr.mxu0 %v209
  %607 = vmatpush1.msra.mxu0 %v208
  %608 = vmatprep.subr.mxu0 %v211
  %609 = vmatpush1.msra.mxu0 %v210
  %610 = vmatprep.subr.mxu0 %v213
  %611 = vmatpush1.msra.mxu0 %v212
  %612 = vmatprep.subr.mxu0 %v215
  %613 = vmatpush1.msra.mxu0 %v214
  %614 = vmatprep.subr.mxu0 %v217
  %615 = vmatpush1.msra.mxu0 %v216
  %616 = vmatprep.mubr.f32.mxu0 %v19
  %617 = vmatmul.mubr.f32.gmra.mrb[0].mxu0 %v18
  %v618 = vpop.f32.mrb[0].mxu0
  %v619 = vadd.f32 %v548, %v618
  %v620 = vpop.f32.mrb[0].mxu0
  %v621 = vadd.f32 %v550, %v620
  %622 = vdwg.mxu0
  %623 = vmatprep.subr.mxu0 %v219
  %624 = vmatpush1.msra.mxu0 %v218
  %625 = vmatprep.subr.mxu0 %v221
  %626 = vmatpush1.msra.mxu0 %v220
  %627 = vmatprep.subr.mxu0 %v223
  %628 = vmatpush1.msra.mxu0 %v222
  %629 = vmatprep.subr.mxu0 %v225
  %630 = vmatpush1.msra.mxu0 %v224
  %631 = vmatprep.subr.mxu0 %v227
  %632 = vmatpush1.msra.mxu0 %v226
  %633 = vmatprep.subr.mxu0 %v229
  %634 = vmatpush1.msra.mxu0 %v228
  %635 = vmatprep.subr.mxu0 %v231
  %636 = vmatpush1.msra.mxu0 %v230
  %637 = vmatprep.subr.mxu0 %v233
  %638 = vmatpush1.msra.mxu0 %v232
  %639 = vmatprep.subr.mxu0 %v235
  %640 = vmatpush1.msra.mxu0 %v234
  %641 = vmatprep.subr.mxu0 %v237
  %642 = vmatpush1.msra.mxu0 %v236
  %643 = vmatprep.subr.mxu0 %v239
  %644 = vmatpush1.msra.mxu0 %v238
  %645 = vmatprep.subr.mxu0 %v241
  %646 = vmatpush1.msra.mxu0 %v240
  %647 = vmatprep.subr.mxu0 %v243
  %648 = vmatpush1.msra.mxu0 %v242
  %649 = vmatprep.subr.mxu0 %v245
  %650 = vmatpush1.msra.mxu0 %v244
  %651 = vmatprep.subr.mxu0 %v247
  %652 = vmatpush1.msra.mxu0 %v246
  %653 = vmatprep.subr.mxu0 %v249
  %654 = vmatpush1.msra.mxu0 %v248
  %655 = vmatprep.subr.mxu0 %v251
  %656 = vmatpush1.msra.mxu0 %v250
  %657 = vmatprep.subr.mxu0 %v253
  %658 = vmatpush1.msra.mxu0 %v252
  %659 = vmatprep.subr.mxu0 %v255
  %660 = vmatpush1.msra.mxu0 %v254
  %661 = vmatprep.subr.mxu0 %v257
  %662 = vmatpush1.msra.mxu0 %v256
  %663 = vmatprep.subr.mxu0 %v259
  %664 = vmatpush1.msra.mxu0 %v258
  %665 = vmatprep.subr.mxu0 %v261
  %666 = vmatpush1.msra.mxu0 %v260
  %667 = vmatprep.subr.mxu0 %v263
  %668 = vmatpush1.msra.mxu0 %v262
  %669 = vmatprep.subr.mxu0 %v265
  %670 = vmatpush1.msra.mxu0 %v264
  %671 = vmatprep.subr.mxu0 %v267
  %672 = vmatpush1.msra.mxu0 %v266
  %673 = vmatprep.subr.mxu0 %v269
  %674 = vmatpush1.msra.mxu0 %v268
  %675 = vmatprep.subr.mxu0 %v271
  %676 = vmatpush1.msra.mxu0 %v270
  %677 = vmatprep.subr.mxu0 %v273
  %678 = vmatpush1.msra.mxu0 %v272
  %679 = vmatprep.subr.mxu0 %v275
  %680 = vmatpush1.msra.mxu0 %v274
  %681 = vmatprep.subr.mxu0 %v277
  %682 = vmatpush1.msra.mxu0 %v276
  %683 = vmatprep.subr.mxu0 %v279
  %684 = vmatpush1.msra.mxu0 %v278
  %685 = vmatprep.subr.mxu0 %v281
  %686 = vmatpush1.msra.mxu0 %v280
  %687 = vmatprep.mubr.f32.mxu0 %v21
  %688 = vmatmul.mubr.f32.gmra.mrb[0].mxu0 %v20
  %v689 = vpop.f32.mrb[0].mxu0
  %v690 = vadd.f32 %v619, %v689
  %v691 = vpop.f32.mrb[0].mxu0
  %v692 = vadd.f32 %v621, %v691
  %693 = vdwg.mxu0
  %694 = vmatprep.subr.mxu0 %v283
  %695 = vmatpush1.msra.mxu0 %v282
  %696 = vmatprep.subr.mxu0 %v285
  %697 = vmatpush1.msra.mxu0 %v284
  %698 = vmatprep.subr.mxu0 %v287
  %699 = vmatpush1.msra.mxu0 %v286
  %700 = vmatprep.subr.mxu0 %v289
  %701 = vmatpush1.msra.mxu0 %v288
  %702 = vmatprep.subr.mxu0 %v291
  %703 = vmatpush1.msra.mxu0 %v290
  %704 = vmatprep.subr.mxu0 %v293
  %705 = vmatpush1.msra.mxu0 %v292
  %706 = vmatprep.subr.mxu0 %v295
  %707 = vmatpush1.msra.mxu0 %v294
  %708 = vmatprep.subr.mxu0 %v297
  %709 = vmatpush1.msra.mxu0 %v296
  %710 = vmatprep.subr.mxu0 %v299
  %711 = vmatpush1.msra.mxu0 %v298
  %712 = vmatprep.subr.mxu0 %v301
  %713 = vmatpush1.msra.mxu0 %v300
  %714 = vmatprep.subr.mxu0 %v303
  %715 = vmatpush1.msra.mxu0 %v302
  %716 = vmatprep.subr.mxu0 %v305
  %717 = vmatpush1.msra.mxu0 %v304
  %718 = vmatprep.subr.mxu0 %v307
  %719 = vmatpush1.msra.mxu0 %v306
  %720 = vmatprep.subr.mxu0 %v309
  %721 = vmatpush1.msra.mxu0 %v308
  %722 = vmatprep.subr.mxu0 %v311
  %723 = vmatpush1.msra.mxu0 %v310
  %724 = vmatprep.subr.mxu0 %v313
  %725 = vmatpush1.msra.mxu0 %v312
  %726 = vmatprep.subr.mxu0 %v315
  %727 = vmatpush1.msra.mxu0 %v314
  %728 = vmatprep.subr.mxu0 %v317
  %729 = vmatpush1.msra.mxu0 %v316
  %730 = vmatprep.subr.mxu0 %v319
  %731 = vmatpush1.msra.mxu0 %v318
  %732 = vmatprep.subr.mxu0 %v321
  %733 = vmatpush1.msra.mxu0 %v320
  %734 = vmatprep.subr.mxu0 %v323
  %735 = vmatpush1.msra.mxu0 %v322
  %736 = vmatprep.subr.mxu0 %v325
  %737 = vmatpush1.msra.mxu0 %v324
  %738 = vmatprep.subr.mxu0 %v327
  %739 = vmatpush1.msra.mxu0 %v326
  %740 = vmatprep.subr.mxu0 %v329
  %741 = vmatpush1.msra.mxu0 %v328
  %742 = vmatprep.subr.mxu0 %v331
  %743 = vmatpush1.msra.mxu0 %v330
  %744 = vmatprep.subr.mxu0 %v333
  %745 = vmatpush1.msra.mxu0 %v332
  %746 = vmatprep.subr.mxu0 %v335
  %747 = vmatpush1.msra.mxu0 %v334
  %748 = vmatprep.subr.mxu0 %v337
  %749 = vmatpush1.msra.mxu0 %v336
  %750 = vmatprep.subr.mxu0 %v339
  %751 = vmatpush1.msra.mxu0 %v338
  %752 = vmatprep.subr.mxu0 %v341
  %753 = vmatpush1.msra.mxu0 %v340
  %754 = vmatprep.subr.mxu0 %v343
  %755 = vmatpush1.msra.mxu0 %v342
  %756 = vmatprep.subr.mxu0 %v345
  %757 = vmatpush1.msra.mxu0 %v344
  %758 = vmatprep.mubr.f32.mxu0 %v23
  %759 = vmatmul.mubr.f32.gmra.mrb[0].mxu0 %v22
  %v760 = vpop.f32.mrb[0].mxu0
  %v761 = vadd.f32 %v690, %v760
  %v762 = vpop.f32.mrb[0].mxu0
  %v763 = vadd.f32 %v692, %v762
  %764 = vdwg.mxu0
  %765 = vmatprep.subr.mxu0 %v347
  %766 = vmatpush1.msra.mxu0 %v346
  %767 = vmatprep.subr.mxu0 %v349
  %768 = vmatpush1.msra.mxu0 %v348
  %769 = vmatprep.subr.mxu0 %v351
  %770 = vmatpush1.msra.mxu0 %v350
  %771 = vmatprep.subr.mxu0 %v353
  %772 = vmatpush1.msra.mxu0 %v352
  %773 = vmatprep.subr.mxu0 %v355
  %774 = vmatpush1.msra.mxu0 %v354
  %775 = vmatprep.subr.mxu0 %v357
  %776 = vmatpush1.msra.mxu0 %v356
  %777 = vmatprep.subr.mxu0 %v359
  %778 = vmatpush1.msra.mxu0 %v358
  %779 = vmatprep.subr.mxu0 %v361
  %780 = vmatpush1.msra.mxu0 %v360
  %781 = vmatprep.subr.mxu0 %v363
  %782 = vmatpush1.msra.mxu0 %v362
  %783 = vmatprep.subr.mxu0 %v365
  %784 = vmatpush1.msra.mxu0 %v364
  %785 = vmatprep.subr.mxu0 %v367
  %786 = vmatpush1.msra.mxu0 %v366
  %787 = vmatprep.subr.mxu0 %v369
  %788 = vmatpush1.msra.mxu0 %v368
  %789 = vmatprep.subr.mxu0 %v371
  %790 = vmatpush1.msra.mxu0 %v370
  %791 = vmatprep.subr.mxu0 %v373
  %792 = vmatpush1.msra.mxu0 %v372
  %793 = vmatprep.subr.mxu0 %v375
  %794 = vmatpush1.msra.mxu0 %v374
  %795 = vmatprep.subr.mxu0 %v377
  %796 = vmatpush1.msra.mxu0 %v376
  %797 = vmatprep.subr.mxu0 %v379
  %798 = vmatpush1.msra.mxu0 %v378
  %799 = vmatprep.subr.mxu0 %v381
  %800 = vmatpush1.msra.mxu0 %v380
  %801 = vmatprep.subr.mxu0 %v383
  %802 = vmatpush1.msra.mxu0 %v382
  %803 = vmatprep.subr.mxu0 %v385
  %804 = vmatpush1.msra.mxu0 %v384
  %805 = vmatprep.subr.mxu0 %v387
  %806 = vmatpush1.msra.mxu0 %v386
  %807 = vmatprep.subr.mxu0 %v389
  %808 = vmatpush1.msra.mxu0 %v388
  %809 = vmatprep.subr.mxu0 %v391
  %810 = vmatpush1.msra.mxu0 %v390
  %811 = vmatprep.subr.mxu0 %v393
  %812 = vmatpush1.msra.mxu0 %v392
  %813 = vmatprep.subr.mxu0 %v395
  %814 = vmatpush1.msra.mxu0 %v394
  %815 = vmatprep.subr.mxu0 %v397
  %816 = vmatpush1.msra.mxu0 %v396
  %817 = vmatprep.subr.mxu0 %v399
  %818 = vmatpush1.msra.mxu0 %v398
  %819 = vmatprep.subr.mxu0 %v401
  %820 = vmatpush1.msra.mxu0 %v400
  %821 = vmatprep.subr.mxu0 %v403
  %822 = vmatpush1.msra.mxu0 %v402
  %823 = vmatprep.subr.mxu0 %v405
  %824 = vmatpush1.msra.mxu0 %v404
  %825 = vmatprep.subr.mxu0 %v407
  %826 = vmatpush1.msra.mxu0 %v406
  %827 = vmatprep.subr.mxu0 %v409
  %828 = vmatpush1.msra.mxu0 %v408
  %829 = vmatprep.mubr.f32.mxu0 %v25
  %830 = vmatmul.mubr.f32.gmra.mrb[0].mxu0 %v24
  %v831 = vpop.f32.mrb[0].mxu0
  %v832 = vadd.f32 %v761, %v831
  %v833 = vpop.f32.mrb[0].mxu0
  %v834 = vadd.f32 %v763, %v833
  %835 = vdwg.mxu0
  %vm836 = vcmask 130048
  %v837 = vsel %vm836, %v834, 0.0
  %v838 = vadd.f32 %v832, %v837
  %839 = vadd.xlane.f32.xlu0 %v838
  %v840 = vpop.xlane.xlu0 %839
  %s841 = scalar_lea.vmem %s0, 3072
  %v842 = vld [vmem:[%s841] sm:$0xff]
  %v843 = vld [vmem:[%s841 + $0x8] sm:$0xff]
  %v844 = vld [vmem:[%s841 + $0x10] sm:$0xff]
  %v845 = vld [vmem:[%s841 + $0x18] sm:$0xff]
  %v846 = vld [vmem:[%s841 + $0x20] sm:$0xff]
  %v847 = vld [vmem:[%s841 + $0x28] sm:$0xff]
  %v848 = vld [vmem:[%s841 + $0x30] sm:$0xff]
  %v849 = vld [vmem:[%s841 + $0x38] sm:$0xff]
  %v850 = vld [vmem:[%s841 + $0x40] sm:$0xff]
  %v851 = vld [vmem:[%s841 + $0x48] sm:$0xff]
  %v852 = vld [vmem:[%s841 + $0x50] sm:$0xff]
  %v853 = vld [vmem:[%s841 + $0x58] sm:$0xff]
  %v854 = vld [vmem:[%s841 + $0x60] sm:$0xff]
  %v855 = vld [vmem:[%s841 + $0x68] sm:$0xff]
  %v856 = vld [vmem:[%s841 + $0x70] sm:$0xff]
  %v857 = vld [vmem:[%s841 + $0x78] sm:$0xff]
  %v858 = vld [vmem:[%s841 + $0x80] sm:$0xff]
  %v859 = vld [vmem:[%s841 + $0x88] sm:$0xff]
  %v860 = vld [vmem:[%s841 + $0x90] sm:$0xff]
  %v861 = vld [vmem:[%s841 + $0x98] sm:$0xff]
  %v862 = vld [vmem:[%s841 + $0xa0] sm:$0xff]
  %v863 = vld [vmem:[%s841 + $0xa8] sm:$0xff]
  %v864 = vld [vmem:[%s841 + $0xb0] sm:$0xff]
  %v865 = vld [vmem:[%s841 + $0xb8] sm:$0xff]
  %v866 = vld [vmem:[%s841 + $0xc0] sm:$0xff]
  %v867 = vld [vmem:[%s841 + $0xc8] sm:$0xff]
  %v868 = vld [vmem:[%s841 + $0xd0] sm:$0xff]
  %v869 = vld [vmem:[%s841 + $0xd8] sm:$0xff]
  %v870 = vld [vmem:[%s841 + $0xe0] sm:$0xff]
  %v871 = vld [vmem:[%s841 + $0xe8] sm:$0xff]
  %v872 = vld [vmem:[%s841 + $0xf0] sm:$0xff]
  %v873 = vld [vmem:[%s841 + $0xf8] sm:$0xff]
  %v874 = vld [vmem:[%s841 + $0x100] sm:$0xff]
  %v875 = vld [vmem:[%s841 + $0x108] sm:$0xff]
  %v876 = vld [vmem:[%s841 + $0x110] sm:$0xff]
  %v877 = vld [vmem:[%s841 + $0x118] sm:$0xff]
  %v878 = vld [vmem:[%s841 + $0x120] sm:$0xff]
  %v879 = vld [vmem:[%s841 + $0x128] sm:$0xff]
  %v880 = vld [vmem:[%s841 + $0x130] sm:$0xff]
  %v881 = vld [vmem:[%s841 + $0x138] sm:$0xff]
  %v882 = vld [vmem:[%s841 + $0x140] sm:$0xff]
  %v883 = vld [vmem:[%s841 + $0x148] sm:$0xff]
  %v884 = vld [vmem:[%s841 + $0x150] sm:$0xff]
  %v885 = vld [vmem:[%s841 + $0x158] sm:$0xff]
  %v886 = vld [vmem:[%s841 + $0x160] sm:$0xff]
  %v887 = vld [vmem:[%s841 + $0x168] sm:$0xff]
  %v888 = vld [vmem:[%s841 + $0x170] sm:$0xff]
  %v889 = vld [vmem:[%s841 + $0x178] sm:$0xff]
  %v890 = vld [vmem:[%s841 + $0x180] sm:$0xff]
  %v891 = vld [vmem:[%s841 + $0x188] sm:$0xff]
  %v892 = vld [vmem:[%s841 + $0x190] sm:$0xff]
  %v893 = vld [vmem:[%s841 + $0x198] sm:$0xff]
  %v894 = vld [vmem:[%s841 + $0x1a0] sm:$0xff]
  %v895 = vld [vmem:[%s841 + $0x1a8] sm:$0xff]
  %v896 = vld [vmem:[%s841 + $0x1b0] sm:$0xff]
  %v897 = vld [vmem:[%s841 + $0x1b8] sm:$0xff]
  %v898 = vld [vmem:[%s841 + $0x1c0] sm:$0xff]
  %v899 = vld [vmem:[%s841 + $0x1c8] sm:$0xff]
  %v900 = vld [vmem:[%s841 + $0x1d0] sm:$0xff]
  %v901 = vld [vmem:[%s841 + $0x1d8] sm:$0xff]
  %v902 = vld [vmem:[%s841 + $0x1e0] sm:$0xff]
  %v903 = vld [vmem:[%s841 + $0x1e8] sm:$0xff]
  %v904 = vld [vmem:[%s841 + $0x1f0] sm:$0xff]
  %v905 = vld [vmem:[%s841 + $0x1f8] sm:$0xff]
  %v906 = vld [vmem:[%s841 + $0x200] sm:$0xff]
  %v907 = vld [vmem:[%s841 + $0x208] sm:$0xff]
  %v908 = vld [vmem:[%s841 + $0x210] sm:$0xff]
  %v909 = vld [vmem:[%s841 + $0x218] sm:$0xff]
  %v910 = vld [vmem:[%s841 + $0x220] sm:$0xff]
  %v911 = vld [vmem:[%s841 + $0x228] sm:$0xff]
  %v912 = vld [vmem:[%s841 + $0x230] sm:$0xff]
  %v913 = vld [vmem:[%s841 + $0x238] sm:$0xff]
  %v914 = vld [vmem:[%s841 + $0x240] sm:$0xff]
  %v915 = vld [vmem:[%s841 + $0x248] sm:$0xff]
  %v916 = vld [vmem:[%s841 + $0x250] sm:$0xff]
  %v917 = vld [vmem:[%s841 + $0x258] sm:$0xff]
  %v918 = vld [vmem:[%s841 + $0x260] sm:$0xff]
  %v919 = vld [vmem:[%s841 + $0x268] sm:$0xff]
  %v920 = vld [vmem:[%s841 + $0x270] sm:$0xff]
  %v921 = vld [vmem:[%s841 + $0x278] sm:$0xff]
  %v922 = vld [vmem:[%s841 + $0x280] sm:$0xff]
  %v923 = vld [vmem:[%s841 + $0x288] sm:$0xff]
  %v924 = vld [vmem:[%s841 + $0x290] sm:$0xff]
  %v925 = vld [vmem:[%s841 + $0x298] sm:$0xff]
  %v926 = vld [vmem:[%s841 + $0x2a0] sm:$0xff]
  %v927 = vld [vmem:[%s841 + $0x2a8] sm:$0xff]
  %v928 = vld [vmem:[%s841 + $0x2b0] sm:$0xff]
  %v929 = vld [vmem:[%s841 + $0x2b8] sm:$0xff]
  %v930 = vld [vmem:[%s841 + $0x2c0] sm:$0xff]
  %v931 = vld [vmem:[%s841 + $0x2c8] sm:$0xff]
  %v932 = vld [vmem:[%s841 + $0x2d0] sm:$0xff]
  %v933 = vld [vmem:[%s841 + $0x2d8] sm:$0xff]
  %v934 = vld [vmem:[%s841 + $0x2e0] sm:$0xff]
  %v935 = vld [vmem:[%s841 + $0x2e8] sm:$0xff]
  %v936 = vld [vmem:[%s841 + $0x2f0] sm:$0xff]
  %v937 = vld [vmem:[%s841 + $0x2f8] sm:$0xff]
  %v938 = vld [vmem:[%s841 + $0x300] sm:$0xff]
  %v939 = vld [vmem:[%s841 + $0x308] sm:$0xff]
  %v940 = vld [vmem:[%s841 + $0x310] sm:$0xff]
  %v941 = vld [vmem:[%s841 + $0x318] sm:$0xff]
  %v942 = vld [vmem:[%s841 + $0x320] sm:$0xff]
  %v943 = vld [vmem:[%s841 + $0x328] sm:$0xff]
  %v944 = vld [vmem:[%s841 + $0x330] sm:$0xff]
  %v945 = vld [vmem:[%s841 + $0x338] sm:$0xff]
  %v946 = vld [vmem:[%s841 + $0x340] sm:$0xff]
  %v947 = vld [vmem:[%s841 + $0x348] sm:$0xff]
  %v948 = vld [vmem:[%s841 + $0x350] sm:$0xff]
  %v949 = vld [vmem:[%s841 + $0x358] sm:$0xff]
  %v950 = vld [vmem:[%s841 + $0x360] sm:$0xff]
  %v951 = vld [vmem:[%s841 + $0x368] sm:$0xff]
  %v952 = vld [vmem:[%s841 + $0x370] sm:$0xff]
  %v953 = vld [vmem:[%s841 + $0x378] sm:$0xff]
  %v954 = vld [vmem:[%s841 + $0x380] sm:$0xff]
  %v955 = vld [vmem:[%s841 + $0x388] sm:$0xff]
  %v956 = vld [vmem:[%s841 + $0x390] sm:$0xff]
  %v957 = vld [vmem:[%s841 + $0x398] sm:$0xff]
  %v958 = vld [vmem:[%s841 + $0x3a0] sm:$0xff]
  %v959 = vld [vmem:[%s841 + $0x3a8] sm:$0xff]
  %v960 = vld [vmem:[%s841 + $0x3b0] sm:$0xff]
  %v961 = vld [vmem:[%s841 + $0x3b8] sm:$0xff]
  %v962 = vld [vmem:[%s841 + $0x3c0] sm:$0xff]
  %v963 = vld [vmem:[%s841 + $0x3c8] sm:$0xff]
  %v964 = vld [vmem:[%s841 + $0x3d0] sm:$0xff]
  %v965 = vld [vmem:[%s841 + $0x3d8] sm:$0xff]
  %v966 = vld [vmem:[%s841 + $0x3e0] sm:$0xff]
  %v967 = vld [vmem:[%s841 + $0x3e8] sm:$0xff]
  %v968 = vld [vmem:[%s841 + $0x3f0] sm:$0xff]
  %v969 = vld [vmem:[%s841 + $0x3f8] sm:$0xff]
  %v970 = vld [vmem:[%s841 + $0x400] sm:$0xff]
  %v971 = vld [vmem:[%s841 + $0x408] sm:$0xff]
  %v972 = vld [vmem:[%s841 + $0x410] sm:$0xff]
  %v973 = vld [vmem:[%s841 + $0x418] sm:$0xff]
  %v974 = vld [vmem:[%s841 + $0x420] sm:$0xff]
  %v975 = vld [vmem:[%s841 + $0x428] sm:$0xff]
  %v976 = vld [vmem:[%s841 + $0x430] sm:$0xff]
  %v977 = vld [vmem:[%s841 + $0x438] sm:$0xff]
  %v978 = vld [vmem:[%s841 + $0x440] sm:$0xff]
  %v979 = vld [vmem:[%s841 + $0x448] sm:$0xff]
  %v980 = vld [vmem:[%s841 + $0x450] sm:$0xff]
  %v981 = vld [vmem:[%s841 + $0x458] sm:$0xff]
  %v982 = vld [vmem:[%s841 + $0x460] sm:$0xff]
  %v983 = vld [vmem:[%s841 + $0x468] sm:$0xff]
  %v984 = vld [vmem:[%s841 + $0x470] sm:$0xff]
  %v985 = vld [vmem:[%s841 + $0x478] sm:$0xff]
  %v986 = vld [vmem:[%s841 + $0x480] sm:$0xff]
  %v987 = vld [vmem:[%s841 + $0x488] sm:$0xff]
  %v988 = vld [vmem:[%s841 + $0x490] sm:$0xff]
  %v989 = vld [vmem:[%s841 + $0x498] sm:$0xff]
  %v990 = vld [vmem:[%s841 + $0x4a0] sm:$0xff]
  %v991 = vld [vmem:[%s841 + $0x4a8] sm:$0xff]
  %v992 = vld [vmem:[%s841 + $0x4b0] sm:$0xff]
  %v993 = vld [vmem:[%s841 + $0x4b8] sm:$0xff]
  %v994 = vld [vmem:[%s841 + $0x4c0] sm:$0xff]
  %v995 = vld [vmem:[%s841 + $0x4c8] sm:$0xff]
  %v996 = vld [vmem:[%s841 + $0x4d0] sm:$0xff]
  %v997 = vld [vmem:[%s841 + $0x4d8] sm:$0xff]
  %v998 = vld [vmem:[%s841 + $0x4e0] sm:$0xff]
  %v999 = vld [vmem:[%s841 + $0x4e8] sm:$0xff]
  %v1000 = vld [vmem:[%s841 + $0x4f0] sm:$0xff]
  %v1001 = vld [vmem:[%s841 + $0x4f8] sm:$0xff]
  %v1002 = vld [vmem:[%s841 + $0x500] sm:$0xff]
  %v1003 = vld [vmem:[%s841 + $0x508] sm:$0xff]
  %v1004 = vld [vmem:[%s841 + $0x510] sm:$0xff]
  %v1005 = vld [vmem:[%s841 + $0x518] sm:$0xff]
  %v1006 = vld [vmem:[%s841 + $0x520] sm:$0xff]
  %v1007 = vld [vmem:[%s841 + $0x528] sm:$0xff]
  %v1008 = vld [vmem:[%s841 + $0x530] sm:$0xff]
  %v1009 = vld [vmem:[%s841 + $0x538] sm:$0xff]
  %v1010 = vld [vmem:[%s841 + $0x540] sm:$0xff]
  %v1011 = vld [vmem:[%s841 + $0x548] sm:$0xff]
  %v1012 = vld [vmem:[%s841 + $0x550] sm:$0xff]
  %v1013 = vld [vmem:[%s841 + $0x558] sm:$0xff]
  %v1014 = vld [vmem:[%s841 + $0x560] sm:$0xff]
  %v1015 = vld [vmem:[%s841 + $0x568] sm:$0xff]
  %v1016 = vld [vmem:[%s841 + $0x570] sm:$0xff]
  %v1017 = vld [vmem:[%s841 + $0x578] sm:$0xff]
  %v1018 = vld [vmem:[%s841 + $0x580] sm:$0xff]
  %v1019 = vld [vmem:[%s841 + $0x588] sm:$0xff]
  %v1020 = vld [vmem:[%s841 + $0x590] sm:$0xff]
  %v1021 = vld [vmem:[%s841 + $0x598] sm:$0xff]
  %v1022 = vld [vmem:[%s841 + $0x5a0] sm:$0xff]
  %v1023 = vld [vmem:[%s841 + $0x5a8] sm:$0xff]
  %v1024 = vld [vmem:[%s841 + $0x5b0] sm:$0xff]
  %v1025 = vld [vmem:[%s841 + $0x5b8] sm:$0xff]
  %v1026 = vld [vmem:[%s841 + $0x5c0] sm:$0xff]
  %v1027 = vld [vmem:[%s841 + $0x5c8] sm:$0xff]
  %v1028 = vld [vmem:[%s841 + $0x5d0] sm:$0xff]
  %v1029 = vld [vmem:[%s841 + $0x5d8] sm:$0xff]
  %v1030 = vld [vmem:[%s841 + $0x5e0] sm:$0xff]
  %v1031 = vld [vmem:[%s841 + $0x5e8] sm:$0xff]
  %v1032 = vld [vmem:[%s841 + $0x5f0] sm:$0xff]
  %v1033 = vld [vmem:[%s841 + $0x5f8] sm:$0xff]
  %v1034 = vld [vmem:[%s841 + $0x600] sm:$0xff]
  %v1035 = vld [vmem:[%s841 + $0x608] sm:$0xff]
  %v1036 = vld [vmem:[%s841 + $0x610] sm:$0xff]
  %v1037 = vld [vmem:[%s841 + $0x618] sm:$0xff]
  %v1038 = vld [vmem:[%s841 + $0x620] sm:$0xff]
  %v1039 = vld [vmem:[%s841 + $0x628] sm:$0xff]
  %v1040 = vld [vmem:[%s841 + $0x630] sm:$0xff]
  %v1041 = vld [vmem:[%s841 + $0x638] sm:$0xff]
  %v1042 = vld [vmem:[%s841 + $0x640] sm:$0xff]
  %v1043 = vld [vmem:[%s841 + $0x648] sm:$0xff]
  %v1044 = vld [vmem:[%s841 + $0x650] sm:$0xff]
  %v1045 = vld [vmem:[%s841 + $0x658] sm:$0xff]
  %v1046 = vld [vmem:[%s841 + $0x660] sm:$0xff]
  %v1047 = vld [vmem:[%s841 + $0x668] sm:$0xff]
  %v1048 = vld [vmem:[%s841 + $0x670] sm:$0xff]
  %v1049 = vld [vmem:[%s841 + $0x678] sm:$0xff]
  %v1050 = vld [vmem:[%s841 + $0x680] sm:$0xff]
  %v1051 = vld [vmem:[%s841 + $0x688] sm:$0xff]
  %v1052 = vld [vmem:[%s841 + $0x690] sm:$0xff]
  %v1053 = vld [vmem:[%s841 + $0x698] sm:$0xff]
  %v1054 = vld [vmem:[%s841 + $0x6a0] sm:$0xff]
  %v1055 = vld [vmem:[%s841 + $0x6a8] sm:$0xff]
  %v1056 = vld [vmem:[%s841 + $0x6b0] sm:$0xff]
  %v1057 = vld [vmem:[%s841 + $0x6b8] sm:$0xff]
  %v1058 = vld [vmem:[%s841 + $0x6c0] sm:$0xff]
  %v1059 = vld [vmem:[%s841 + $0x6c8] sm:$0xff]
  %v1060 = vld [vmem:[%s841 + $0x6d0] sm:$0xff]
  %v1061 = vld [vmem:[%s841 + $0x6d8] sm:$0xff]
  %v1062 = vld [vmem:[%s841 + $0x6e0] sm:$0xff]
  %v1063 = vld [vmem:[%s841 + $0x6e8] sm:$0xff]
  %v1064 = vld [vmem:[%s841 + $0x6f0] sm:$0xff]
  %v1065 = vld [vmem:[%s841 + $0x6f8] sm:$0xff]
  %v1066 = vld [vmem:[%s841 + $0x700] sm:$0xff]
  %v1067 = vld [vmem:[%s841 + $0x708] sm:$0xff]
  %v1068 = vld [vmem:[%s841 + $0x710] sm:$0xff]
  %v1069 = vld [vmem:[%s841 + $0x718] sm:$0xff]
  %v1070 = vld [vmem:[%s841 + $0x720] sm:$0xff]
  %v1071 = vld [vmem:[%s841 + $0x728] sm:$0xff]
  %v1072 = vld [vmem:[%s841 + $0x730] sm:$0xff]
  %v1073 = vld [vmem:[%s841 + $0x738] sm:$0xff]
  %v1074 = vld [vmem:[%s841 + $0x740] sm:$0xff]
  %v1075 = vld [vmem:[%s841 + $0x748] sm:$0xff]
  %v1076 = vld [vmem:[%s841 + $0x750] sm:$0xff]
  %v1077 = vld [vmem:[%s841 + $0x758] sm:$0xff]
  %v1078 = vld [vmem:[%s841 + $0x760] sm:$0xff]
  %v1079 = vld [vmem:[%s841 + $0x768] sm:$0xff]
  %v1080 = vld [vmem:[%s841 + $0x770] sm:$0xff]
  %v1081 = vld [vmem:[%s841 + $0x778] sm:$0xff]
  %v1082 = vld [vmem:[%s841 + $0x780] sm:$0xff]
  %v1083 = vld [vmem:[%s841 + $0x788] sm:$0xff]
  %v1084 = vld [vmem:[%s841 + $0x790] sm:$0xff]
  %v1085 = vld [vmem:[%s841 + $0x798] sm:$0xff]
  %v1086 = vld [vmem:[%s841 + $0x7a0] sm:$0xff]
  %v1087 = vld [vmem:[%s841 + $0x7a8] sm:$0xff]
  %v1088 = vld [vmem:[%s841 + $0x7b0] sm:$0xff]
  %v1089 = vld [vmem:[%s841 + $0x7b8] sm:$0xff]
  %v1090 = vld [vmem:[%s841 + $0x7c0] sm:$0xff]
  %v1091 = vld [vmem:[%s841 + $0x7c8] sm:$0xff]
  %v1092 = vld [vmem:[%s841 + $0x7d0] sm:$0xff]
  %v1093 = vld [vmem:[%s841 + $0x7d8] sm:$0xff]
  %v1094 = vld [vmem:[%s841 + $0x7e0] sm:$0xff]
  %v1095 = vld [vmem:[%s841 + $0x7e8] sm:$0xff]
  %v1096 = vld [vmem:[%s841 + $0x7f0] sm:$0xff]
  %v1097 = vld [vmem:[%s841 + $0x7f8] sm:$0xff]
  %v1098 = vld [vmem:[%s841 + $0x800] sm:$0xff]
  %v1099 = vld [vmem:[%s841 + $0x808] sm:$0xff]
  %v1100 = vld [vmem:[%s841 + $0x810] sm:$0xff]
  %v1101 = vld [vmem:[%s841 + $0x818] sm:$0xff]
  %v1102 = vld [vmem:[%s841 + $0x820] sm:$0xff]
  %v1103 = vld [vmem:[%s841 + $0x828] sm:$0xff]
  %v1104 = vld [vmem:[%s841 + $0x830] sm:$0xff]
  %v1105 = vld [vmem:[%s841 + $0x838] sm:$0xff]
  %v1106 = vld [vmem:[%s841 + $0x840] sm:$0xff]
  %v1107 = vld [vmem:[%s841 + $0x848] sm:$0xff]
  %v1108 = vld [vmem:[%s841 + $0x850] sm:$0xff]
  %v1109 = vld [vmem:[%s841 + $0x858] sm:$0xff]
  %v1110 = vld [vmem:[%s841 + $0x860] sm:$0xff]
  %v1111 = vld [vmem:[%s841 + $0x868] sm:$0xff]
  %v1112 = vld [vmem:[%s841 + $0x870] sm:$0xff]
  %v1113 = vld [vmem:[%s841 + $0x878] sm:$0xff]
  %v1114 = vld [vmem:[%s841 + $0x880] sm:$0xff]
  %v1115 = vld [vmem:[%s841 + $0x888] sm:$0xff]
  %v1116 = vld [vmem:[%s841 + $0x890] sm:$0xff]
  %v1117 = vld [vmem:[%s841 + $0x898] sm:$0xff]
  %v1118 = vld [vmem:[%s841 + $0x8a0] sm:$0xff]
  %v1119 = vld [vmem:[%s841 + $0x8a8] sm:$0xff]
  %v1120 = vld [vmem:[%s841 + $0x8b0] sm:$0xff]
  %v1121 = vld [vmem:[%s841 + $0x8b8] sm:$0xff]
  %v1122 = vld [vmem:[%s841 + $0x8c0] sm:$0xff]
  %v1123 = vld [vmem:[%s841 + $0x8c8] sm:$0xff]
  %v1124 = vld [vmem:[%s841 + $0x8d0] sm:$0xff]
  %v1125 = vld [vmem:[%s841 + $0x8d8] sm:$0xff]
  %v1126 = vld [vmem:[%s841 + $0x8e0] sm:$0xff]
  %v1127 = vld [vmem:[%s841 + $0x8e8] sm:$0xff]
  %v1128 = vld [vmem:[%s841 + $0x8f0] sm:$0xff]
  %v1129 = vld [vmem:[%s841 + $0x8f8] sm:$0xff]
  %v1130 = vld [vmem:[%s841 + $0x900] sm:$0xff]
  %v1131 = vld [vmem:[%s841 + $0x908] sm:$0xff]
  %v1132 = vld [vmem:[%s841 + $0x910] sm:$0xff]
  %v1133 = vld [vmem:[%s841 + $0x918] sm:$0xff]
  %v1134 = vld [vmem:[%s841 + $0x920] sm:$0xff]
  %v1135 = vld [vmem:[%s841 + $0x928] sm:$0xff]
  %v1136 = vld [vmem:[%s841 + $0x930] sm:$0xff]
  %v1137 = vld [vmem:[%s841 + $0x938] sm:$0xff]
  %v1138 = vld [vmem:[%s841 + $0x940] sm:$0xff]
  %v1139 = vld [vmem:[%s841 + $0x948] sm:$0xff]
  %v1140 = vld [vmem:[%s841 + $0x950] sm:$0xff]
  %v1141 = vld [vmem:[%s841 + $0x958] sm:$0xff]
  %v1142 = vld [vmem:[%s841 + $0x960] sm:$0xff]
  %v1143 = vld [vmem:[%s841 + $0x968] sm:$0xff]
  %v1144 = vld [vmem:[%s841 + $0x970] sm:$0xff]
  %v1145 = vld [vmem:[%s841 + $0x978] sm:$0xff]
  %v1146 = vld [vmem:[%s841 + $0x980] sm:$0xff]
  %v1147 = vld [vmem:[%s841 + $0x988] sm:$0xff]
  %v1148 = vld [vmem:[%s841 + $0x990] sm:$0xff]
  %v1149 = vld [vmem:[%s841 + $0x998] sm:$0xff]
  %v1150 = vld [vmem:[%s841 + $0x9a0] sm:$0xff]
  %v1151 = vld [vmem:[%s841 + $0x9a8] sm:$0xff]
  %v1152 = vld [vmem:[%s841 + $0x9b0] sm:$0xff]
  %v1153 = vld [vmem:[%s841 + $0x9b8] sm:$0xff]
  %v1154 = vld [vmem:[%s841 + $0x9c0] sm:$0xff]
  %v1155 = vld [vmem:[%s841 + $0x9c8] sm:$0xff]
  %v1156 = vld [vmem:[%s841 + $0x9d0] sm:$0xff]
  %v1157 = vld [vmem:[%s841 + $0x9d8] sm:$0xff]
  %v1158 = vld [vmem:[%s841 + $0x9e0] sm:$0xff]
  %v1159 = vld [vmem:[%s841 + $0x9e8] sm:$0xff]
  %v1160 = vld [vmem:[%s841 + $0x9f0] sm:$0xff]
  %v1161 = vld [vmem:[%s841 + $0x9f8] sm:$0xff]
  %v1162 = vld [vmem:[%s841 + $0xa00] sm:$0xff]
  %v1163 = vld [vmem:[%s841 + $0xa08] sm:$0xff]
  %v1164 = vld [vmem:[%s841 + $0xa10] sm:$0xff]
  %v1165 = vld [vmem:[%s841 + $0xa18] sm:$0xff]
  %v1166 = vld [vmem:[%s841 + $0xa20] sm:$0xff]
  %v1167 = vld [vmem:[%s841 + $0xa28] sm:$0xff]
  %v1168 = vld [vmem:[%s841 + $0xa30] sm:$0xff]
  %v1169 = vld [vmem:[%s841 + $0xa38] sm:$0xff]
  %v1170 = vld [vmem:[%s841 + $0xa40] sm:$0xff]
  %v1171 = vld [vmem:[%s841 + $0xa48] sm:$0xff]
  %v1172 = vld [vmem:[%s841 + $0xa50] sm:$0xff]
  %v1173 = vld [vmem:[%s841 + $0xa58] sm:$0xff]
  %v1174 = vld [vmem:[%s841 + $0xa60] sm:$0xff]
  %v1175 = vld [vmem:[%s841 + $0xa68] sm:$0xff]
  %v1176 = vld [vmem:[%s841 + $0xa70] sm:$0xff]
  %v1177 = vld [vmem:[%s841 + $0xa78] sm:$0xff]
  %v1178 = vld [vmem:[%s841 + $0xa80] sm:$0xff]
  %v1179 = vld [vmem:[%s841 + $0xa88] sm:$0xff]
  %v1180 = vld [vmem:[%s841 + $0xa90] sm:$0xff]
  %v1181 = vld [vmem:[%s841 + $0xa98] sm:$0xff]
  %v1182 = vld [vmem:[%s841 + $0xaa0] sm:$0xff]
  %v1183 = vld [vmem:[%s841 + $0xaa8] sm:$0xff]
  %v1184 = vld [vmem:[%s841 + $0xab0] sm:$0xff]
  %v1185 = vld [vmem:[%s841 + $0xab8] sm:$0xff]
  %v1186 = vld [vmem:[%s841 + $0xac0] sm:$0xff]
  %v1187 = vld [vmem:[%s841 + $0xac8] sm:$0xff]
  %v1188 = vld [vmem:[%s841 + $0xad0] sm:$0xff]
  %v1189 = vld [vmem:[%s841 + $0xad8] sm:$0xff]
  %v1190 = vld [vmem:[%s841 + $0xae0] sm:$0xff]
  %v1191 = vld [vmem:[%s841 + $0xae8] sm:$0xff]
  %v1192 = vld [vmem:[%s841 + $0xaf0] sm:$0xff]
  %v1193 = vld [vmem:[%s841 + $0xaf8] sm:$0xff]
  %v1194 = vld [vmem:[%s841 + $0xb00] sm:$0xff]
  %v1195 = vld [vmem:[%s841 + $0xb08] sm:$0xff]
  %v1196 = vld [vmem:[%s841 + $0xb10] sm:$0xff]
  %v1197 = vld [vmem:[%s841 + $0xb18] sm:$0xff]
  %v1198 = vld [vmem:[%s841 + $0xb20] sm:$0xff]
  %v1199 = vld [vmem:[%s841 + $0xb28] sm:$0xff]
  %v1200 = vld [vmem:[%s841 + $0xb30] sm:$0xff]
  %v1201 = vld [vmem:[%s841 + $0xb38] sm:$0xff]
  %v1202 = vld [vmem:[%s841 + $0xb40] sm:$0xff]
  %v1203 = vld [vmem:[%s841 + $0xb48] sm:$0xff]
  %v1204 = vld [vmem:[%s841 + $0xb50] sm:$0xff]
  %v1205 = vld [vmem:[%s841 + $0xb58] sm:$0xff]
  %v1206 = vld [vmem:[%s841 + $0xb60] sm:$0xff]
  %v1207 = vld [vmem:[%s841 + $0xb68] sm:$0xff]
  %v1208 = vld [vmem:[%s841 + $0xb70] sm:$0xff]
  %v1209 = vld [vmem:[%s841 + $0xb78] sm:$0xff]
  %v1210 = vld [vmem:[%s841 + $0xb80] sm:$0xff]
  %v1211 = vld [vmem:[%s841 + $0xb88] sm:$0xff]
  %v1212 = vld [vmem:[%s841 + $0xb90] sm:$0xff]
  %v1213 = vld [vmem:[%s841 + $0xb98] sm:$0xff]
  %v1214 = vld [vmem:[%s841 + $0xba0] sm:$0xff]
  %v1215 = vld [vmem:[%s841 + $0xba8] sm:$0xff]
  %v1216 = vld [vmem:[%s841 + $0xbb0] sm:$0xff]
  %v1217 = vld [vmem:[%s841 + $0xbb8] sm:$0xff]
  %v1218 = vld [vmem:[%s841 + $0xbc0] sm:$0xff]
  %v1219 = vld [vmem:[%s841 + $0xbc8] sm:$0xff]
  %v1220 = vld [vmem:[%s841 + $0xbd0] sm:$0xff]
  %v1221 = vld [vmem:[%s841 + $0xbd8] sm:$0xff]
  %v1222 = vld [vmem:[%s841 + $0xbe0] sm:$0xff]
  %v1223 = vld [vmem:[%s841 + $0xbe8] sm:$0xff]
  %v1224 = vld [vmem:[%s841 + $0xbf0] sm:$0xff]
  %v1225 = vld [vmem:[%s841 + $0xbf8] sm:$0xff]
  %1226 = vmatprep.subr.mxu0 %v843
  %1227 = vmatpush1.msra.mxu0 %v842
  %1228 = vmatprep.subr.mxu0 %v845
  %1229 = vmatpush1.msra.mxu0 %v844
  %1230 = vmatprep.subr.mxu0 %v847
  %1231 = vmatpush1.msra.mxu0 %v846
  %1232 = vmatprep.subr.mxu0 %v849
  %1233 = vmatpush1.msra.mxu0 %v848
  %1234 = vmatprep.subr.mxu0 %v851
  %1235 = vmatpush1.msra.mxu0 %v850
  %1236 = vmatprep.subr.mxu0 %v853
  %1237 = vmatpush1.msra.mxu0 %v852
  %1238 = vmatprep.subr.mxu0 %v855
  %1239 = vmatpush1.msra.mxu0 %v854
  %1240 = vmatprep.subr.mxu0 %v857
  %1241 = vmatpush1.msra.mxu0 %v856
  %1242 = vmatprep.subr.mxu0 %v859
  %1243 = vmatpush1.msra.mxu0 %v858
  %1244 = vmatprep.subr.mxu0 %v861
  %1245 = vmatpush1.msra.mxu0 %v860
  %1246 = vmatprep.subr.mxu0 %v863
  %1247 = vmatpush1.msra.mxu0 %v862
  %1248 = vmatprep.subr.mxu0 %v865
  %1249 = vmatpush1.msra.mxu0 %v864
  %1250 = vmatprep.subr.mxu0 %v867
  %1251 = vmatpush1.msra.mxu0 %v866
  %1252 = vmatprep.subr.mxu0 %v869
  %1253 = vmatpush1.msra.mxu0 %v868
  %1254 = vmatprep.subr.mxu0 %v871
  %1255 = vmatpush1.msra.mxu0 %v870
  %1256 = vmatprep.subr.mxu0 %v873
  %1257 = vmatpush1.msra.mxu0 %v872
  %1258 = vmatprep.subr.mxu0 %v875
  %1259 = vmatpush1.msra.mxu0 %v874
  %1260 = vmatprep.subr.mxu0 %v877
  %1261 = vmatpush1.msra.mxu0 %v876
  %1262 = vmatprep.subr.mxu0 %v879
  %1263 = vmatpush1.msra.mxu0 %v878
  %1264 = vmatprep.subr.mxu0 %v881
  %1265 = vmatpush1.msra.mxu0 %v880
  %1266 = vmatprep.subr.mxu0 %v883
  %1267 = vmatpush1.msra.mxu0 %v882
  %1268 = vmatprep.subr.mxu0 %v885
  %1269 = vmatpush1.msra.mxu0 %v884
  %1270 = vmatprep.subr.mxu0 %v887
  %1271 = vmatpush1.msra.mxu0 %v886
  %1272 = vmatprep.subr.mxu0 %v889
  %1273 = vmatpush1.msra.mxu0 %v888
  %1274 = vmatprep.subr.mxu0 %v891
  %1275 = vmatpush1.msra.mxu0 %v890
  %1276 = vmatprep.subr.mxu0 %v893
  %1277 = vmatpush1.msra.mxu0 %v892
  %1278 = vmatprep.subr.mxu0 %v895
  %1279 = vmatpush1.msra.mxu0 %v894
  %1280 = vmatprep.subr.mxu0 %v897
  %1281 = vmatpush1.msra.mxu0 %v896
  %1282 = vmatprep.subr.mxu0 %v899
  %1283 = vmatpush1.msra.mxu0 %v898
  %1284 = vmatprep.subr.mxu0 %v901
  %1285 = vmatpush1.msra.mxu0 %v900
  %1286 = vmatprep.subr.mxu0 %v903
  %1287 = vmatpush1.msra.mxu0 %v902
  %1288 = vmatprep.subr.mxu0 %v905
  %1289 = vmatpush1.msra.mxu0 %v904
  %1290 = vmatprep.mubr.f32.mxu0 %v15
  %1291 = vmatmul.mubr.f32.gmra.mrb[0].mxu0 %v14
  %v1292 = vpop.f32.mrb[0].mxu0
  %v1293 = vadd.f32 0.0, %v1292
  %v1294 = vpop.f32.mrb[0].mxu0
  %v1295 = vadd.f32 0.0, %v1294
  %1296 = vdwg.mxu0
  %1297 = vmatprep.subr.mxu0 %v907
  %1298 = vmatpush1.msra.mxu0 %v906
  %1299 = vmatprep.subr.mxu0 %v909
  %1300 = vmatpush1.msra.mxu0 %v908
  %1301 = vmatprep.subr.mxu0 %v911
  %1302 = vmatpush1.msra.mxu0 %v910
  %1303 = vmatprep.subr.mxu0 %v913
  %1304 = vmatpush1.msra.mxu0 %v912
  %1305 = vmatprep.subr.mxu0 %v915
  %1306 = vmatpush1.msra.mxu0 %v914
  %1307 = vmatprep.subr.mxu0 %v917
  %1308 = vmatpush1.msra.mxu0 %v916
  %1309 = vmatprep.subr.mxu0 %v919
  %1310 = vmatpush1.msra.mxu0 %v918
  %1311 = vmatprep.subr.mxu0 %v921
  %1312 = vmatpush1.msra.mxu0 %v920
  %1313 = vmatprep.subr.mxu0 %v923
  %1314 = vmatpush1.msra.mxu0 %v922
  %1315 = vmatprep.subr.mxu0 %v925
  %1316 = vmatpush1.msra.mxu0 %v924
  %1317 = vmatprep.subr.mxu0 %v927
  %1318 = vmatpush1.msra.mxu0 %v926
  %1319 = vmatprep.subr.mxu0 %v929
  %1320 = vmatpush1.msra.mxu0 %v928
  %1321 = vmatprep.subr.mxu0 %v931
  %1322 = vmatpush1.msra.mxu0 %v930
  %1323 = vmatprep.subr.mxu0 %v933
  %1324 = vmatpush1.msra.mxu0 %v932
  %1325 = vmatprep.subr.mxu0 %v935
  %1326 = vmatpush1.msra.mxu0 %v934
  %1327 = vmatprep.subr.mxu0 %v937
  %1328 = vmatpush1.msra.mxu0 %v936
  %1329 = vmatprep.subr.mxu0 %v939
  %1330 = vmatpush1.msra.mxu0 %v938
  %1331 = vmatprep.subr.mxu0 %v941
  %1332 = vmatpush1.msra.mxu0 %v940
  %1333 = vmatprep.subr.mxu0 %v943
  %1334 = vmatpush1.msra.mxu0 %v942
  %1335 = vmatprep.subr.mxu0 %v945
  %1336 = vmatpush1.msra.mxu0 %v944
  %1337 = vmatprep.subr.mxu0 %v947
  %1338 = vmatpush1.msra.mxu0 %v946
  %1339 = vmatprep.subr.mxu0 %v949
  %1340 = vmatpush1.msra.mxu0 %v948
  %1341 = vmatprep.subr.mxu0 %v951
  %1342 = vmatpush1.msra.mxu0 %v950
  %1343 = vmatprep.subr.mxu0 %v953
  %1344 = vmatpush1.msra.mxu0 %v952
  %1345 = vmatprep.subr.mxu0 %v955
  %1346 = vmatpush1.msra.mxu0 %v954
  %1347 = vmatprep.subr.mxu0 %v957
  %1348 = vmatpush1.msra.mxu0 %v956
  %1349 = vmatprep.subr.mxu0 %v959
  %1350 = vmatpush1.msra.mxu0 %v958
  %1351 = vmatprep.subr.mxu0 %v961
  %1352 = vmatpush1.msra.mxu0 %v960
  %1353 = vmatprep.subr.mxu0 %v963
  %1354 = vmatpush1.msra.mxu0 %v962
  %1355 = vmatprep.subr.mxu0 %v965
  %1356 = vmatpush1.msra.mxu0 %v964
  %1357 = vmatprep.subr.mxu0 %v967
  %1358 = vmatpush1.msra.mxu0 %v966
  %1359 = vmatprep.subr.mxu0 %v969
  %1360 = vmatpush1.msra.mxu0 %v968
  %1361 = vmatprep.mubr.f32.mxu0 %v17
  %1362 = vmatmul.mubr.f32.gmra.mrb[0].mxu0 %v16
  %v1363 = vpop.f32.mrb[0].mxu0
  %v1364 = vadd.f32 %v1293, %v1363
  %v1365 = vpop.f32.mrb[0].mxu0
  %v1366 = vadd.f32 %v1295, %v1365
  %1367 = vdwg.mxu0
  %1368 = vmatprep.subr.mxu0 %v971
  %1369 = vmatpush1.msra.mxu0 %v970
  %1370 = vmatprep.subr.mxu0 %v973
  %1371 = vmatpush1.msra.mxu0 %v972
  %1372 = vmatprep.subr.mxu0 %v975
  %1373 = vmatpush1.msra.mxu0 %v974
  %1374 = vmatprep.subr.mxu0 %v977
  %1375 = vmatpush1.msra.mxu0 %v976
  %1376 = vmatprep.subr.mxu0 %v979
  %1377 = vmatpush1.msra.mxu0 %v978
  %1378 = vmatprep.subr.mxu0 %v981
  %1379 = vmatpush1.msra.mxu0 %v980
  %1380 = vmatprep.subr.mxu0 %v983
  %1381 = vmatpush1.msra.mxu0 %v982
  %1382 = vmatprep.subr.mxu0 %v985
  %1383 = vmatpush1.msra.mxu0 %v984
  %1384 = vmatprep.subr.mxu0 %v987
  %1385 = vmatpush1.msra.mxu0 %v986
  %1386 = vmatprep.subr.mxu0 %v989
  %1387 = vmatpush1.msra.mxu0 %v988
  %1388 = vmatprep.subr.mxu0 %v991
  %1389 = vmatpush1.msra.mxu0 %v990
  %1390 = vmatprep.subr.mxu0 %v993
  %1391 = vmatpush1.msra.mxu0 %v992
  %1392 = vmatprep.subr.mxu0 %v995
  %1393 = vmatpush1.msra.mxu0 %v994
  %1394 = vmatprep.subr.mxu0 %v997
  %1395 = vmatpush1.msra.mxu0 %v996
  %1396 = vmatprep.subr.mxu0 %v999
  %1397 = vmatpush1.msra.mxu0 %v998
  %1398 = vmatprep.subr.mxu0 %v1001
  %1399 = vmatpush1.msra.mxu0 %v1000
  %1400 = vmatprep.subr.mxu0 %v1003
  %1401 = vmatpush1.msra.mxu0 %v1002
  %1402 = vmatprep.subr.mxu0 %v1005
  %1403 = vmatpush1.msra.mxu0 %v1004
  %1404 = vmatprep.subr.mxu0 %v1007
  %1405 = vmatpush1.msra.mxu0 %v1006
  %1406 = vmatprep.subr.mxu0 %v1009
  %1407 = vmatpush1.msra.mxu0 %v1008
  %1408 = vmatprep.subr.mxu0 %v1011
  %1409 = vmatpush1.msra.mxu0 %v1010
  %1410 = vmatprep.subr.mxu0 %v1013
  %1411 = vmatpush1.msra.mxu0 %v1012
  %1412 = vmatprep.subr.mxu0 %v1015
  %1413 = vmatpush1.msra.mxu0 %v1014
  %1414 = vmatprep.subr.mxu0 %v1017
  %1415 = vmatpush1.msra.mxu0 %v1016
  %1416 = vmatprep.subr.mxu0 %v1019
  %1417 = vmatpush1.msra.mxu0 %v1018
  %1418 = vmatprep.subr.mxu0 %v1021
  %1419 = vmatpush1.msra.mxu0 %v1020
  %1420 = vmatprep.subr.mxu0 %v1023
  %1421 = vmatpush1.msra.mxu0 %v1022
  %1422 = vmatprep.subr.mxu0 %v1025
  %1423 = vmatpush1.msra.mxu0 %v1024
  %1424 = vmatprep.subr.mxu0 %v1027
  %1425 = vmatpush1.msra.mxu0 %v1026
  %1426 = vmatprep.subr.mxu0 %v1029
  %1427 = vmatpush1.msra.mxu0 %v1028
  %1428 = vmatprep.subr.mxu0 %v1031
  %1429 = vmatpush1.msra.mxu0 %v1030
  %1430 = vmatprep.subr.mxu0 %v1033
  %1431 = vmatpush1.msra.mxu0 %v1032
  %1432 = vmatprep.mubr.f32.mxu0 %v19
  %1433 = vmatmul.mubr.f32.gmra.mrb[0].mxu0 %v18
  %v1434 = vpop.f32.mrb[0].mxu0
  %v1435 = vadd.f32 %v1364, %v1434
  %v1436 = vpop.f32.mrb[0].mxu0
  %v1437 = vadd.f32 %v1366, %v1436
  %1438 = vdwg.mxu0
  %1439 = vmatprep.subr.mxu0 %v1035
  %1440 = vmatpush1.msra.mxu0 %v1034
  %1441 = vmatprep.subr.mxu0 %v1037
  %1442 = vmatpush1.msra.mxu0 %v1036
  %1443 = vmatprep.subr.mxu0 %v1039
  %1444 = vmatpush1.msra.mxu0 %v1038
  %1445 = vmatprep.subr.mxu0 %v1041
  %1446 = vmatpush1.msra.mxu0 %v1040
  %1447 = vmatprep.subr.mxu0 %v1043
  %1448 = vmatpush1.msra.mxu0 %v1042
  %1449 = vmatprep.subr.mxu0 %v1045
  %1450 = vmatpush1.msra.mxu0 %v1044
  %1451 = vmatprep.subr.mxu0 %v1047
  %1452 = vmatpush1.msra.mxu0 %v1046
  %1453 = vmatprep.subr.mxu0 %v1049
  %1454 = vmatpush1.msra.mxu0 %v1048
  %1455 = vmatprep.subr.mxu0 %v1051
  %1456 = vmatpush1.msra.mxu0 %v1050
  %1457 = vmatprep.subr.mxu0 %v1053
  %1458 = vmatpush1.msra.mxu0 %v1052
  %1459 = vmatprep.subr.mxu0 %v1055
  %1460 = vmatpush1.msra.mxu0 %v1054
  %1461 = vmatprep.subr.mxu0 %v1057
  %1462 = vmatpush1.msra.mxu0 %v1056
  %1463 = vmatprep.subr.mxu0 %v1059
  %1464 = vmatpush1.msra.mxu0 %v1058
  %1465 = vmatprep.subr.mxu0 %v1061
  %1466 = vmatpush1.msra.mxu0 %v1060
  %1467 = vmatprep.subr.mxu0 %v1063
  %1468 = vmatpush1.msra.mxu0 %v1062
  %1469 = vmatprep.subr.mxu0 %v1065
  %1470 = vmatpush1.msra.mxu0 %v1064
  %1471 = vmatprep.subr.mxu0 %v1067
  %1472 = vmatpush1.msra.mxu0 %v1066
  %1473 = vmatprep.subr.mxu0 %v1069
  %1474 = vmatpush1.msra.mxu0 %v1068
  %1475 = vmatprep.subr.mxu0 %v1071
  %1476 = vmatpush1.msra.mxu0 %v1070
  %1477 = vmatprep.subr.mxu0 %v1073
  %1478 = vmatpush1.msra.mxu0 %v1072
  %1479 = vmatprep.subr.mxu0 %v1075
  %1480 = vmatpush1.msra.mxu0 %v1074
  %1481 = vmatprep.subr.mxu0 %v1077
  %1482 = vmatpush1.msra.mxu0 %v1076
  %1483 = vmatprep.subr.mxu0 %v1079
  %1484 = vmatpush1.msra.mxu0 %v1078
  %1485 = vmatprep.subr.mxu0 %v1081
  %1486 = vmatpush1.msra.mxu0 %v1080
  %1487 = vmatprep.subr.mxu0 %v1083
  %1488 = vmatpush1.msra.mxu0 %v1082
  %1489 = vmatprep.subr.mxu0 %v1085
  %1490 = vmatpush1.msra.mxu0 %v1084
  %1491 = vmatprep.subr.mxu0 %v1087
  %1492 = vmatpush1.msra.mxu0 %v1086
  %1493 = vmatprep.subr.mxu0 %v1089
  %1494 = vmatpush1.msra.mxu0 %v1088
  %1495 = vmatprep.subr.mxu0 %v1091
  %1496 = vmatpush1.msra.mxu0 %v1090
  %1497 = vmatprep.subr.mxu0 %v1093
  %1498 = vmatpush1.msra.mxu0 %v1092
  %1499 = vmatprep.subr.mxu0 %v1095
  %1500 = vmatpush1.msra.mxu0 %v1094
  %1501 = vmatprep.subr.mxu0 %v1097
  %1502 = vmatpush1.msra.mxu0 %v1096
  %1503 = vmatprep.mubr.f32.mxu0 %v21
  %1504 = vmatmul.mubr.f32.gmra.mrb[0].mxu0 %v20
  %v1505 = vpop.f32.mrb[0].mxu0
  %v1506 = vadd.f32 %v1435, %v1505
  %v1507 = vpop.f32.mrb[0].mxu0
  %v1508 = vadd.f32 %v1437, %v1507
  %1509 = vdwg.mxu0
  %1510 = vmatprep.subr.mxu0 %v1099
  %1511 = vmatpush1.msra.mxu0 %v1098
  %1512 = vmatprep.subr.mxu0 %v1101
  %1513 = vmatpush1.msra.mxu0 %v1100
  %1514 = vmatprep.subr.mxu0 %v1103
  %1515 = vmatpush1.msra.mxu0 %v1102
  %1516 = vmatprep.subr.mxu0 %v1105
  %1517 = vmatpush1.msra.mxu0 %v1104
  %1518 = vmatprep.subr.mxu0 %v1107
  %1519 = vmatpush1.msra.mxu0 %v1106
  %1520 = vmatprep.subr.mxu0 %v1109
  %1521 = vmatpush1.msra.mxu0 %v1108
  %1522 = vmatprep.subr.mxu0 %v1111
  %1523 = vmatpush1.msra.mxu0 %v1110
  %1524 = vmatprep.subr.mxu0 %v1113
  %1525 = vmatpush1.msra.mxu0 %v1112
  %1526 = vmatprep.subr.mxu0 %v1115
  %1527 = vmatpush1.msra.mxu0 %v1114
  %1528 = vmatprep.subr.mxu0 %v1117
  %1529 = vmatpush1.msra.mxu0 %v1116
  %1530 = vmatprep.subr.mxu0 %v1119
  %1531 = vmatpush1.msra.mxu0 %v1118
  %1532 = vmatprep.subr.mxu0 %v1121
  %1533 = vmatpush1.msra.mxu0 %v1120
  %1534 = vmatprep.subr.mxu0 %v1123
  %1535 = vmatpush1.msra.mxu0 %v1122
  %1536 = vmatprep.subr.mxu0 %v1125
  %1537 = vmatpush1.msra.mxu0 %v1124
  %1538 = vmatprep.subr.mxu0 %v1127
  %1539 = vmatpush1.msra.mxu0 %v1126
  %1540 = vmatprep.subr.mxu0 %v1129
  %1541 = vmatpush1.msra.mxu0 %v1128
  %1542 = vmatprep.subr.mxu0 %v1131
  %1543 = vmatpush1.msra.mxu0 %v1130
  %1544 = vmatprep.subr.mxu0 %v1133
  %1545 = vmatpush1.msra.mxu0 %v1132
  %1546 = vmatprep.subr.mxu0 %v1135
  %1547 = vmatpush1.msra.mxu0 %v1134
  %1548 = vmatprep.subr.mxu0 %v1137
  %1549 = vmatpush1.msra.mxu0 %v1136
  %1550 = vmatprep.subr.mxu0 %v1139
  %1551 = vmatpush1.msra.mxu0 %v1138
  %1552 = vmatprep.subr.mxu0 %v1141
  %1553 = vmatpush1.msra.mxu0 %v1140
  %1554 = vmatprep.subr.mxu0 %v1143
  %1555 = vmatpush1.msra.mxu0 %v1142
  %1556 = vmatprep.subr.mxu0 %v1145
  %1557 = vmatpush1.msra.mxu0 %v1144
  %1558 = vmatprep.subr.mxu0 %v1147
  %1559 = vmatpush1.msra.mxu0 %v1146
  %1560 = vmatprep.subr.mxu0 %v1149
  %1561 = vmatpush1.msra.mxu0 %v1148
  %1562 = vmatprep.subr.mxu0 %v1151
  %1563 = vmatpush1.msra.mxu0 %v1150
  %1564 = vmatprep.subr.mxu0 %v1153
  %1565 = vmatpush1.msra.mxu0 %v1152
  %1566 = vmatprep.subr.mxu0 %v1155
  %1567 = vmatpush1.msra.mxu0 %v1154
  %1568 = vmatprep.subr.mxu0 %v1157
  %1569 = vmatpush1.msra.mxu0 %v1156
  %1570 = vmatprep.subr.mxu0 %v1159
  %1571 = vmatpush1.msra.mxu0 %v1158
  %1572 = vmatprep.subr.mxu0 %v1161
  %1573 = vmatpush1.msra.mxu0 %v1160
  %1574 = vmatprep.mubr.f32.mxu0 %v23
  %1575 = vmatmul.mubr.f32.gmra.mrb[0].mxu0 %v22
  %v1576 = vpop.f32.mrb[0].mxu0
  %v1577 = vadd.f32 %v1506, %v1576
  %v1578 = vpop.f32.mrb[0].mxu0
  %v1579 = vadd.f32 %v1508, %v1578
  %1580 = vdwg.mxu0
  %1581 = vmatprep.subr.mxu0 %v1163
  %1582 = vmatpush1.msra.mxu0 %v1162
  %1583 = vmatprep.subr.mxu0 %v1165
  %1584 = vmatpush1.msra.mxu0 %v1164
  %1585 = vmatprep.subr.mxu0 %v1167
  %1586 = vmatpush1.msra.mxu0 %v1166
  %1587 = vmatprep.subr.mxu0 %v1169
  %1588 = vmatpush1.msra.mxu0 %v1168
  %1589 = vmatprep.subr.mxu0 %v1171
  %1590 = vmatpush1.msra.mxu0 %v1170
  %1591 = vmatprep.subr.mxu0 %v1173
  %1592 = vmatpush1.msra.mxu0 %v1172
  %1593 = vmatprep.subr.mxu0 %v1175
  %1594 = vmatpush1.msra.mxu0 %v1174
  %1595 = vmatprep.subr.mxu0 %v1177
  %1596 = vmatpush1.msra.mxu0 %v1176
  %1597 = vmatprep.subr.mxu0 %v1179
  %1598 = vmatpush1.msra.mxu0 %v1178
  %1599 = vmatprep.subr.mxu0 %v1181
  %1600 = vmatpush1.msra.mxu0 %v1180
  %1601 = vmatprep.subr.mxu0 %v1183
  %1602 = vmatpush1.msra.mxu0 %v1182
  %1603 = vmatprep.subr.mxu0 %v1185
  %1604 = vmatpush1.msra.mxu0 %v1184
  %1605 = vmatprep.subr.mxu0 %v1187
  %1606 = vmatpush1.msra.mxu0 %v1186
  %1607 = vmatprep.subr.mxu0 %v1189
  %1608 = vmatpush1.msra.mxu0 %v1188
  %1609 = vmatprep.subr.mxu0 %v1191
  %1610 = vmatpush1.msra.mxu0 %v1190
  %1611 = vmatprep.subr.mxu0 %v1193
  %1612 = vmatpush1.msra.mxu0 %v1192
  %1613 = vmatprep.subr.mxu0 %v1195
  %1614 = vmatpush1.msra.mxu0 %v1194
  %1615 = vmatprep.subr.mxu0 %v1197
  %1616 = vmatpush1.msra.mxu0 %v1196
  %1617 = vmatprep.subr.mxu0 %v1199
  %1618 = vmatpush1.msra.mxu0 %v1198
  %1619 = vmatprep.subr.mxu0 %v1201
  %1620 = vmatpush1.msra.mxu0 %v1200
  %1621 = vmatprep.subr.mxu0 %v1203
  %1622 = vmatpush1.msra.mxu0 %v1202
  %1623 = vmatprep.subr.mxu0 %v1205
  %1624 = vmatpush1.msra.mxu0 %v1204
  %1625 = vmatprep.subr.mxu0 %v1207
  %1626 = vmatpush1.msra.mxu0 %v1206
  %1627 = vmatprep.subr.mxu0 %v1209
  %1628 = vmatpush1.msra.mxu0 %v1208
  %1629 = vmatprep.subr.mxu0 %v1211
  %1630 = vmatpush1.msra.mxu0 %v1210
  %1631 = vmatprep.subr.mxu0 %v1213
  %1632 = vmatpush1.msra.mxu0 %v1212
  %1633 = vmatprep.subr.mxu0 %v1215
  %1634 = vmatpush1.msra.mxu0 %v1214
  %1635 = vmatprep.subr.mxu0 %v1217
  %1636 = vmatpush1.msra.mxu0 %v1216
  %1637 = vmatprep.subr.mxu0 %v1219
  %1638 = vmatpush1.msra.mxu0 %v1218
  %1639 = vmatprep.subr.mxu0 %v1221
  %1640 = vmatpush1.msra.mxu0 %v1220
  %1641 = vmatprep.subr.mxu0 %v1223
  %1642 = vmatpush1.msra.mxu0 %v1222
  %1643 = vmatprep.subr.mxu0 %v1225
  %1644 = vmatpush1.msra.mxu0 %v1224
  %1645 = vmatprep.mubr.f32.mxu0 %v25
  %1646 = vmatmul.mubr.f32.gmra.mrb[0].mxu0 %v24
  %v1647 = vpop.f32.mrb[0].mxu0
  %v1648 = vadd.f32 %v1577, %v1647
  %v1649 = vpop.f32.mrb[0].mxu0
  %v1650 = vadd.f32 %v1579, %v1649
  %1651 = vdwg.mxu0
  %v1652 = vsel %vm836, %v1650, 0.0
  %v1653 = vadd.f32 %v1648, %v1652
  %1654 = vadd.xlane.f32.xlu0 %v1653
  %v1655 = vpop.xlane.xlu0 %1654
  %vm1656 = vcmask 7168
  %v1657 = vsel %vm1656, %v840, %v1655
  %v1658 = vmul.f32 %v1657, 0.0069444445
  %v1659 = vld [vmem:[%s2] sm:$0xff]
  %1661 = vset.pattern.permute.xlu0 0
  %1662 = vperm.xlu0 %1661, %v1659
  %v1663 = vpop.permute.xlu0 %1662
  %v1665 = vadd.f32 %v1658, %v1663
  %vm1666 = vcmask 15360
  %1667 = vst.msk [vmem:[%s3] sm:$0xff] %vm1666, %v1665
  // Predicated region
  $region14: #{tpu_custom_call.1} parent=0 // pred_check
    _
  $region15: #{tpu_custom_call.1} parent=0 // pred_check_branch
    %1669 = sbr.rel (0) target = $region17
  $region16: #{tpu_custom_call.1} parent=0 // pred_region
    _
  $region17: #{tpu_custom_call.1} parent=0 // pred_fallthru
    _
  // Predicated region
  $region18: #{tpu_custom_call.1} parent=0 // pred_check
    _
  $region19: #{tpu_custom_call.1} parent=0 // pred_check_branch
    %1671 = sbr.rel (0) target = $region21
  $region20: #{tpu_custom_call.1} parent=0 // pred_region
    _
  $region21: #{tpu_custom_call.1} parent=0 // pred_fallthru
    _

</llo_original>
